<compile_context>
chip_gen: v6e
topology: v6e:2x2x1
jax: 0.10.0
libtpu: 0.0.40
codegen_flags: <defaults>
</compile_context>

<pallas_src>
import math
import functools

import jax
import jax.numpy as jnp
import numpy as np
from jax import lax
from jax.experimental import pallas as pl
from jax.experimental.pallas import tpu as pltpu


def _mha_kernel(q_ref, k_ref, v_ref,
                wq_ref, wk_ref, wv_ref, wo_ref,
                bq_ref, bk_ref, bv_ref, bo_ref,
                out_ref,
                ctx_ref,
                *, num_heads, head_size, attention_scale):
    d = head_size

    xq = q_ref[...]          # (S, H) bf16
    xk = k_ref[...]
    xv = v_ref[...]

    # Full-width projections: (S,H) @ (H,H) — full MXU depth, once per batch.
    qp = jnp.dot(xq, wq_ref[...], preferred_element_type=jnp.float32) + bq_ref[...]
    kp = jnp.dot(xk, wk_ref[...], preferred_element_type=jnp.float32) + bk_ref[...]
    vp = jnp.dot(xv, wv_ref[...], preferred_element_type=jnp.float32) + bv_ref[...]

    if attention_scale:
        # Fold 1/sqrt(d) into Q (S*H elems) instead of every (S,S) score tile.
        qp = qp * (1.0 / math.sqrt(d))

    qp = qp.astype(jnp.bfloat16)                       # (S, H)
    kT = jnp.transpose(kp.astype(jnp.bfloat16))        # (H, S) — one transpose/batch
    vp = vp.astype(jnp.bfloat16)                       # (S, H)

    # Static per-head loop (nh is small); all slices are static.
    # TODO(synk): lax.fori_loop + Q-tiling for long S to bound live ranges.
    for h in range(num_heads):
        lo = h * d
        qh = qp[:, lo:lo + d]        # (S, d)  lane slice
        kTh = kT[lo:lo + d, :]       # (d, S)  sublane slice -> plain NN dot
        vh = vp[:, lo:lo + d]        # (S, d)

        scores = jnp.dot(qh, kTh, preferred_element_type=jnp.float32)   # (S, S)

        # Numerically-stable softmax along the last axis (f32).
        m = jnp.max(scores, axis=-1, keepdims=True)
        e = jnp.exp(scores - m)
        denom = jnp.sum(e, axis=-1, keepdims=True)
        probs = (e * pl.reciprocal(denom, approx=False)).astype(jnp.bfloat16)
        # dropout == identity (inference)

        ctx_h = jnp.dot(probs, vh, preferred_element_type=jnp.float32)  # (S, d)
        ctx_ref[:, lo:lo + d] = ctx_h.astype(jnp.bfloat16)

    # Single full-depth output projection: (S,H) @ (H,H) + bias, f32 accumulate.
    out = jnp.dot(ctx_ref[...], wo_ref[...],
                  preferred_element_type=jnp.float32) + bo_ref[...]
    out_ref[...] = out.astype(out_ref.dtype)


def multi_head_attention(query, key, value, params, *,
                         num_heads, attention_scale=True):
    """query/key/value: (B, S, H) float32. Returns (B, S, H) float32."""
    B, S, H = query.shape
    assert H % num_heads == 0
    d = H // num_heads
    out_dtype = query.dtype

    # bf16 matmul operands: higher MXU throughput on v6e/v7x, half the DMA bytes.
    q_bf = query.astype(jnp.bfloat16)
    k_bf = key.astype(jnp.bfloat16)
    v_bf = value.astype(jnp.bfloat16)

    wq = params["wq"].astype(jnp.bfloat16)
    wk = params["wk"].astype(jnp.bfloat16)
    wv = params["wv"].astype(jnp.bfloat16)
    wo = params["wo"].astype(jnp.bfloat16)
    bq = params["bq"].astype(jnp.float32)
    bk = params["bk"].astype(jnp.float32)
    bv = params["bv"].astype(jnp.float32)
    bo = params["bo"].astype(jnp.float32)

    kernel = functools.partial(
        _mha_kernel,
        num_heads=num_heads,
        head_size=d,
        attention_scale=attention_scale,
    )

    # Squeezed leading batch dim -> kernel sees 2-D (S, H) activation refs.
    act_spec = pl.BlockSpec((None, S, H), lambda b: (b, 0, 0))
    out_spec = pl.BlockSpec((None, S, H), lambda b: (b, 0, 0))
    # Constant index_map => weights/biases DMA'd once and kept VMEM-resident.
    w_spec = pl.BlockSpec((H, H), lambda b: (0, 0))
    b_spec = pl.BlockSpec((1, H), lambda b: (0, 0))

    flops = int(2 * B * S * H * H * 4 + 2 * 2 * B * num_heads * S * S * d)
    transcendentals = int(B * num_heads * S * S)
    bytes_accessed = int(3 * B * S * H * 2      # activations in (bf16)
                         + 4 * H * H * 2        # weights, fetched once (bf16)
                         + 4 * H * 4            # biases (f32)
                         + B * S * H * 4)       # output (f32)

    return pl.pallas_call(
        kernel,
        out_shape=jax.ShapeDtypeStruct((B, S, H), out_dtype),
        grid_spec=pltpu.PrefetchScalarGridSpec(
            num_scalar_prefetch=0,
            grid=(B,),                                # batch only, fully parallel
            in_specs=[act_spec, act_spec, act_spec,
                      w_spec, w_spec, w_spec, w_spec,
                      b_spec, b_spec, b_spec, b_spec],
            out_specs=out_spec,
            scratch_shapes=[pltpu.VMEM((S, H), jnp.bfloat16)],   # context scratch
        ),
        compiler_params=pltpu.CompilerParams(
            dimension_semantics=("parallel",),
            # No vmem_limit_bytes override: defaults are safe on v5e/v6e/v7x.
        ),
        cost_estimate=pl.CostEstimate(flops=flops,
                                      transcendentals=transcendentals,
                                      bytes_accessed=bytes_accessed),
    )(q_bf, k_bf, v_bf, wq, wk, wv, wo, bq, bk, bv, bo)


def _reference(query, key, value, params, *, num_heads, attention_scale=True):
    """Pure-JAX f32 reference mirroring the PyTorch forward (no mask, eval dropout)."""
    B, S, H = query.shape
    d = H // num_heads

    def proj(x, w, b):
        return x @ w + b

    def split_heads(x):  # (B,S,H) -> (B,nh,S,d)
        return x.reshape(B, S, num_heads, d).transpose(0, 2, 1, 3)

    q = split_heads(proj(query, params["wq"], params["bq"]))
    k = split_heads(proj(key, params["wk"], params["bk"]))
    v = split_heads(proj(value, params["wv"], params["bv"]))

    scores = jnp.einsum("bhqd,bhkd->bhqk", q, k)
    if attention_scale:
        scores = scores / math.sqrt(d)
    probs = jax.nn.softmax(scores, axis=-1)
    ctx = jnp.einsum("bhqk,bhkd->bhqd", probs, v)
    ctx = ctx.transpose(0, 2, 1, 3).reshape(B, S, H)
    return ctx @ params["wo"] + params["bo"]


if __name__ == "__main__":
    B, S, H = 2, 8, 32
    NUM_HEADS = 4

    key0 = jax.random.PRNGKey(0)
    keys = jax.random.split(key0, 12)

    def init_w(k):
        return jax.random.normal(k, (H, H), dtype=jnp.float32) * 0.05

    def init_b(k):
        return jax.random.normal(k, (1, H), dtype=jnp.float32) * 0.01

    params = {
        "wq": init_w(keys[0]), "bq": init_b(keys[1]),
        "wk": init_w(keys[2]), "bk": init_b(keys[3]),
        "wv": init_w(keys[4]), "bv": init_b(keys[5]),
        "wo": init_w(keys[6]), "bo": init_b(keys[7]),
    }

    query = jax.random.normal(keys[8], (B, S, H), dtype=jnp.float32)
    key_in = jax.random.normal(keys[9], (B, S, H), dtype=jnp.float32)
    value = jax.random.normal(keys[10], (B, S, H), dtype=jnp.float32)

    out = multi_head_attention(query, key_in, value, params,
                               num_heads=NUM_HEADS, attention_scale=True)
    out = jax.block_until_ready(out)

    ref = _reference(query, key_in, value, params,
                     num_heads=NUM_HEADS, attention_scale=True)
    # Tolerance loosened vs. pure f32: bf16 MXU operands in all GEMMs.
    np.testing.assert_allclose(np.asarray(out), np.asarray(ref),
                               rtol=2e-2, atol=2e-2)

    print("KERNEL_OK")
</pallas_src>

<mosaic_0001>
module attributes {stable_mosaic.version = 11 : i64} {
  func.func @_mha_kernel(%arg0: i32, %arg1: memref<1x8x32xbf16, #tpu.memory_space<vmem>>, %arg2: memref<1x8x32xbf16, #tpu.memory_space<vmem>>, %arg3: memref<1x8x32xbf16, #tpu.memory_space<vmem>>, %arg4: memref<32x32xbf16, #tpu.memory_space<vmem>>, %arg5: memref<32x32xbf16, #tpu.memory_space<vmem>>, %arg6: memref<32x32xbf16, #tpu.memory_space<vmem>>, %arg7: memref<32x32xbf16, #tpu.memory_space<vmem>>, %arg8: memref<1x32xf32, #tpu.memory_space<vmem>>, %arg9: memref<1x32xf32, #tpu.memory_space<vmem>>, %arg10: memref<1x32xf32, #tpu.memory_space<vmem>>, %arg11: memref<1x32xf32, #tpu.memory_space<vmem>>, %arg12: memref<1x8x32xf32, #tpu.memory_space<vmem>>, %arg13: memref<8x32xbf16, #tpu.memory_space<vmem>>) attributes {dimension_semantics = [#tpu.dimension_semantics<parallel>], iteration_bounds = array<i64: 2>, scalar_prefetch = 0 : i64, scratch_operands = 1 : i64, tpu.core_type = #tpu.core_type<tc>, window_params = [{transform_indices = @transform_0, window_bounds = array<i64: 1, 8, 32>}, {transform_indices = @transform_1, window_bounds = array<i64: 1, 8, 32>}, {transform_indices = @transform_2, window_bounds = array<i64: 1, 8, 32>}, {pipeline_mode = #tpu.pipeline_mode<synchronous>, transform_indices = @transform_3, window_bounds = array<i64: 32, 32>}, {pipeline_mode = #tpu.pipeline_mode<synchronous>, transform_indices = @transform_4, window_bounds = array<i64: 32, 32>}, {pipeline_mode = #tpu.pipeline_mode<synchronous>, transform_indices = @transform_5, window_bounds = array<i64: 32, 32>}, {pipeline_mode = #tpu.pipeline_mode<synchronous>, transform_indices = @transform_6, window_bounds = array<i64: 32, 32>}, {pipeline_mode = #tpu.pipeline_mode<synchronous>, transform_indices = @transform_7, window_bounds = array<i64: 1, 32>}, {pipeline_mode = #tpu.pipeline_mode<synchronous>, transform_indices = @transform_8, window_bounds = array<i64: 1, 32>}, {pipeline_mode = #tpu.pipeline_mode<synchronous>, transform_indices = @transform_9, window_bounds = array<i64: 1, 32>}, {pipeline_mode = #tpu.pipeline_mode<synchronous>, transform_indices = @transform_10, window_bounds = array<i64: 1, 32>}, {transform_indices = @transform_11, window_bounds = array<i64: 1, 8, 32>}]} {
    %c0 = arith.constant 0 : index
    %c0_0 = arith.constant 0 : index
    %c0_1 = arith.constant 0 : index
    %0 = vector.load %arg1[%c0, %c0_0, %c0_1] : memref<1x8x32xbf16, #tpu.memory_space<vmem>>, vector<1x8x32xbf16>
    %1 = vector.shape_cast %0 : vector<1x8x32xbf16> to vector<8x32xbf16>
    %c0_2 = arith.constant 0 : index
    %c0_3 = arith.constant 0 : index
    %c0_4 = arith.constant 0 : index
    %2 = vector.load %arg2[%c0_2, %c0_3, %c0_4] : memref<1x8x32xbf16, #tpu.memory_space<vmem>>, vector<1x8x32xbf16>
    %3 = vector.shape_cast %2 : vector<1x8x32xbf16> to vector<8x32xbf16>
    %c0_5 = arith.constant 0 : index
    %c0_6 = arith.constant 0 : index
    %c0_7 = arith.constant 0 : index
    %4 = vector.load %arg3[%c0_5, %c0_6, %c0_7] : memref<1x8x32xbf16, #tpu.memory_space<vmem>>, vector<1x8x32xbf16>
    %5 = vector.shape_cast %4 : vector<1x8x32xbf16> to vector<8x32xbf16>
    %c0_8 = arith.constant 0 : index
    %c0_9 = arith.constant 0 : index
    %6 = vector.load %arg4[%c0_8, %c0_9] : memref<32x32xbf16, #tpu.memory_space<vmem>>, vector<32x32xbf16>
    %cst = arith.constant dense<0.000000e+00> : vector<8x32xf32>
    %7 = tpu.matmul %1, %6, %cst {dimension_numbers = #tpu.dot_dimension_numbers<[1], [0], [0], [1], [0, 0, 1, 1], [], []>} : vector<8x32xbf16>, vector<32x32xbf16>, vector<8x32xf32> -> vector<8x32xf32>
    %c0_10 = arith.constant 0 : index
    %c0_11 = arith.constant 0 : index
    %8 = vector.load %arg8[%c0_10, %c0_11] : memref<1x32xf32, #tpu.memory_space<vmem>>, vector<1x32xf32>
    %9 = vector.broadcast %8 : vector<1x32xf32> to vector<8x32xf32>
    %10 = arith.addf %7, %9 : vector<8x32xf32>
    %c0_12 = arith.constant 0 : index
    %c0_13 = arith.constant 0 : index
    %11 = vector.load %arg5[%c0_12, %c0_13] : memref<32x32xbf16, #tpu.memory_space<vmem>>, vector<32x32xbf16>
    %cst_14 = arith.constant dense<0.000000e+00> : vector<8x32xf32>
    %12 = tpu.matmul %3, %11, %cst_14 {dimension_numbers = #tpu.dot_dimension_numbers<[1], [0], [0], [1], [0, 0, 1, 1], [], []>} : vector<8x32xbf16>, vector<32x32xbf16>, vector<8x32xf32> -> vector<8x32xf32>
    %c0_15 = arith.constant 0 : index
    %c0_16 = arith.constant 0 : index
    %13 = vector.load %arg9[%c0_15, %c0_16] : memref<1x32xf32, #tpu.memory_space<vmem>>, vector<1x32xf32>
    %14 = vector.broadcast %13 : vector<1x32xf32> to vector<8x32xf32>
    %15 = arith.addf %12, %14 : vector<8x32xf32>
    %c0_17 = arith.constant 0 : index
    %c0_18 = arith.constant 0 : index
    %16 = vector.load %arg6[%c0_17, %c0_18] : memref<32x32xbf16, #tpu.memory_space<vmem>>, vector<32x32xbf16>
    %cst_19 = arith.constant dense<0.000000e+00> : vector<8x32xf32>
    %17 = tpu.matmul %5, %16, %cst_19 {dimension_numbers = #tpu.dot_dimension_numbers<[1], [0], [0], [1], [0, 0, 1, 1], [], []>} : vector<8x32xbf16>, vector<32x32xbf16>, vector<8x32xf32> -> vector<8x32xf32>
    %c0_20 = arith.constant 0 : index
    %c0_21 = arith.constant 0 : index
    %18 = vector.load %arg10[%c0_20, %c0_21] : memref<1x32xf32, #tpu.memory_space<vmem>>, vector<1x32xf32>
    %19 = vector.broadcast %18 : vector<1x32xf32> to vector<8x32xf32>
    %20 = arith.addf %17, %19 : vector<8x32xf32>
    %cst_22 = arith.constant 0.353553385 : f32
    %21 = vector.broadcast %cst_22 : f32 to vector<8x32xf32>
    %22 = arith.mulf %10, %21 : vector<8x32xf32>
    %23 = arith.truncf %22 : vector<8x32xf32> to vector<8x32xbf16>
    %24 = arith.truncf %15 : vector<8x32xf32> to vector<8x32xbf16>
    %25 = tpu.transpose %24, [1, 0] : vector<8x32xbf16> -> vector<32x8xbf16>
    %26 = arith.truncf %20 : vector<8x32xf32> to vector<8x32xbf16>
    %27 = vector.extract_strided_slice %23 {offsets = [0, 0], sizes = [8, 8], strides = [1, 1]} : vector<8x32xbf16> to vector<8x8xbf16>
    %28 = vector.extract_strided_slice %25 {offsets = [0, 0], sizes = [8, 8], strides = [1, 1]} : vector<32x8xbf16> to vector<8x8xbf16>
    %29 = vector.extract_strided_slice %26 {offsets = [0, 0], sizes = [8, 8], strides = [1, 1]} : vector<8x32xbf16> to vector<8x8xbf16>
    %cst_23 = arith.constant dense<0.000000e+00> : vector<8x8xf32>
    %30 = tpu.matmul %27, %28, %cst_23 {dimension_numbers = #tpu.dot_dimension_numbers<[1], [0], [0], [1], [0, 0, 1, 1], [], []>} : vector<8x8xbf16>, vector<8x8xbf16>, vector<8x8xf32> -> vector<8x8xf32>
    %cst_24 = arith.constant dense<0xFF800000> : vector<8xf32>
    %31 = vector.multi_reduction <maximumf>, %30, %cst_24 [1] : vector<8x8xf32> to vector<8xf32>
    %32 = vector.shape_cast %31 : vector<8xf32> to vector<8x1xf32>
    %33 = vector.broadcast %32 : vector<8x1xf32> to vector<8x8xf32>
    %34 = arith.subf %30, %33 : vector<8x8xf32>
    %35 = math.exp %34 : vector<8x8xf32>
    %cst_25 = arith.constant dense<0.000000e+00> : vector<8xf32>
    %36 = vector.multi_reduction <add>, %35, %cst_25 [1] : vector<8x8xf32> to vector<8xf32>
    %37 = vector.shape_cast %36 : vector<8xf32> to vector<8x1xf32>
    %38 = tpu.reciprocal %37 : vector<8x1xf32> -> vector<8x1xf32>
    %39 = vector.broadcast %38 : vector<8x1xf32> to vector<8x8xf32>
    %40 = arith.mulf %35, %39 : vector<8x8xf32>
    %41 = arith.truncf %40 : vector<8x8xf32> to vector<8x8xbf16>
    %cst_26 = arith.constant dense<0.000000e+00> : vector<8x8xf32>
    %42 = tpu.matmul %41, %29, %cst_26 {dimension_numbers = #tpu.dot_dimension_numbers<[1], [0], [0], [1], [0, 0, 1, 1], [], []>} : vector<8x8xbf16>, vector<8x8xbf16>, vector<8x8xf32> -> vector<8x8xf32>
    %43 = arith.truncf %42 : vector<8x8xf32> to vector<8x8xbf16>
    %c0_27 = arith.constant 0 : index
    %c0_28 = arith.constant 0 : index
    %44 = vector.load %arg13[%c0_27, %c0_28] : memref<8x32xbf16, #tpu.memory_space<vmem>>, vector<8x8xbf16>
    tpu.vector_store %arg13[%c0_27, %c0_28], %43 {strides = array<i32>} : memref<8x32xbf16, #tpu.memory_space<vmem>>, vector<8x8xbf16>,
    %45 = vector.extract_strided_slice %23 {offsets = [0, 8], sizes = [8, 8], strides = [1, 1]} : vector<8x32xbf16> to vector<8x8xbf16>
    %46 = vector.extract_strided_slice %25 {offsets = [8, 0], sizes = [8, 8], strides = [1, 1]} : vector<32x8xbf16> to vector<8x8xbf16>
    %47 = vector.extract_strided_slice %26 {offsets = [0, 8], sizes = [8, 8], strides = [1, 1]} : vector<8x32xbf16> to vector<8x8xbf16>
    %cst_29 = arith.constant dense<0.000000e+00> : vector<8x8xf32>
    %48 = tpu.matmul %45, %46, %cst_29 {dimension_numbers = #tpu.dot_dimension_numbers<[1], [0], [0], [1], [0, 0, 1, 1], [], []>} : vector<8x8xbf16>, vector<8x8xbf16>, vector<8x8xf32> -> vector<8x8xf32>
    %cst_30 = arith.constant dense<0xFF800000> : vector<8xf32>
    %49 = vector.multi_reduction <maximumf>, %48, %cst_30 [1] : vector<8x8xf32> to vector<8xf32>
    %50 = vector.shape_cast %49 : vector<8xf32> to vector<8x1xf32>
    %51 = vector.broadcast %50 : vector<8x1xf32> to vector<8x8xf32>
    %52 = arith.subf %48, %51 : vector<8x8xf32>
    %53 = math.exp %52 : vector<8x8xf32>
    %cst_31 = arith.constant dense<0.000000e+00> : vector<8xf32>
    %54 = vector.multi_reduction <add>, %53, %cst_31 [1] : vector<8x8xf32> to vector<8xf32>
    %55 = vector.shape_cast %54 : vector<8xf32> to vector<8x1xf32>
    %56 = tpu.reciprocal %55 : vector<8x1xf32> -> vector<8x1xf32>
    %57 = vector.broadcast %56 : vector<8x1xf32> to vector<8x8xf32>
    %58 = arith.mulf %53, %57 : vector<8x8xf32>
    %59 = arith.truncf %58 : vector<8x8xf32> to vector<8x8xbf16>
    %cst_32 = arith.constant dense<0.000000e+00> : vector<8x8xf32>
    %60 = tpu.matmul %59, %47, %cst_32 {dimension_numbers = #tpu.dot_dimension_numbers<[1], [0], [0], [1], [0, 0, 1, 1], [], []>} : vector<8x8xbf16>, vector<8x8xbf16>, vector<8x8xf32> -> vector<8x8xf32>
    %61 = arith.truncf %60 : vector<8x8xf32> to vector<8x8xbf16>
    %c0_33 = arith.constant 0 : index
    %c8 = arith.constant 8 : index
    %62 = vector.load %arg13[%c0_33, %c8] : memref<8x32xbf16, #tpu.memory_space<vmem>>, vector<8x8xbf16>
    tpu.vector_store %arg13[%c0_33, %c8], %61 {strides = array<i32>} : memref<8x32xbf16, #tpu.memory_space<vmem>>, vector<8x8xbf16>,
    %63 = vector.extract_strided_slice %23 {offsets = [0, 16], sizes = [8, 8], strides = [1, 1]} : vector<8x32xbf16> to vector<8x8xbf16>
    %64 = vector.extract_strided_slice %25 {offsets = [16, 0], sizes = [8, 8], strides = [1, 1]} : vector<32x8xbf16> to vector<8x8xbf16>
    %65 = vector.extract_strided_slice %26 {offsets = [0, 16], sizes = [8, 8], strides = [1, 1]} : vector<8x32xbf16> to vector<8x8xbf16>
    %cst_34 = arith.constant dense<0.000000e+00> : vector<8x8xf32>
    %66 = tpu.matmul %63, %64, %cst_34 {dimension_numbers = #tpu.dot_dimension_numbers<[1], [0], [0], [1], [0, 0, 1, 1], [], []>} : vector<8x8xbf16>, vector<8x8xbf16>, vector<8x8xf32> -> vector<8x8xf32>
    %cst_35 = arith.constant dense<0xFF800000> : vector<8xf32>
    %67 = vector.multi_reduction <maximumf>, %66, %cst_35 [1] : vector<8x8xf32> to vector<8xf32>
    %68 = vector.shape_cast %67 : vector<8xf32> to vector<8x1xf32>
    %69 = vector.broadcast %68 : vector<8x1xf32> to vector<8x8xf32>
    %70 = arith.subf %66, %69 : vector<8x8xf32>
    %71 = math.exp %70 : vector<8x8xf32>
    %cst_36 = arith.constant dense<0.000000e+00> : vector<8xf32>
    %72 = vector.multi_reduction <add>, %71, %cst_36 [1] : vector<8x8xf32> to vector<8xf32>
    %73 = vector.shape_cast %72 : vector<8xf32> to vector<8x1xf32>
    %74 = tpu.reciprocal %73 : vector<8x1xf32> -> vector<8x1xf32>
    %75 = vector.broadcast %74 : vector<8x1xf32> to vector<8x8xf32>
    %76 = arith.mulf %71, %75 : vector<8x8xf32>
    %77 = arith.truncf %76 : vector<8x8xf32> to vector<8x8xbf16>
    %cst_37 = arith.constant dense<0.000000e+00> : vector<8x8xf32>
    %78 = tpu.matmul %77, %65, %cst_37 {dimension_numbers = #tpu.dot_dimension_numbers<[1], [0], [0], [1], [0, 0, 1, 1], [], []>} : vector<8x8xbf16>, vector<8x8xbf16>, vector<8x8xf32> -> vector<8x8xf32>
    %79 = arith.truncf %78 : vector<8x8xf32> to vector<8x8xbf16>
    %c0_38 = arith.constant 0 : index
    %c16 = arith.constant 16 : index
    %80 = vector.load %arg13[%c0_38, %c16] : memref<8x32xbf16, #tpu.memory_space<vmem>>, vector<8x8xbf16>
    tpu.vector_store %arg13[%c0_38, %c16], %79 {strides = array<i32>} : memref<8x32xbf16, #tpu.memory_space<vmem>>, vector<8x8xbf16>,
    %81 = vector.extract_strided_slice %23 {offsets = [0, 24], sizes = [8, 8], strides = [1, 1]} : vector<8x32xbf16> to vector<8x8xbf16>
    %82 = vector.extract_strided_slice %25 {offsets = [24, 0], sizes = [8, 8], strides = [1, 1]} : vector<32x8xbf16> to vector<8x8xbf16>
    %83 = vector.extract_strided_slice %26 {offsets = [0, 24], sizes = [8, 8], strides = [1, 1]} : vector<8x32xbf16> to vector<8x8xbf16>
    %cst_39 = arith.constant dense<0.000000e+00> : vector<8x8xf32>
    %84 = tpu.matmul %81, %82, %cst_39 {dimension_numbers = #tpu.dot_dimension_numbers<[1], [0], [0], [1], [0, 0, 1, 1], [], []>} : vector<8x8xbf16>, vector<8x8xbf16>, vector<8x8xf32> -> vector<8x8xf32>
    %cst_40 = arith.constant dense<0xFF800000> : vector<8xf32>
    %85 = vector.multi_reduction <maximumf>, %84, %cst_40 [1] : vector<8x8xf32> to vector<8xf32>
    %86 = vector.shape_cast %85 : vector<8xf32> to vector<8x1xf32>
    %87 = vector.broadcast %86 : vector<8x1xf32> to vector<8x8xf32>
    %88 = arith.subf %84, %87 : vector<8x8xf32>
    %89 = math.exp %88 : vector<8x8xf32>
    %cst_41 = arith.constant dense<0.000000e+00> : vector<8xf32>
    %90 = vector.multi_reduction <add>, %89, %cst_41 [1] : vector<8x8xf32> to vector<8xf32>
    %91 = vector.shape_cast %90 : vector<8xf32> to vector<8x1xf32>
    %92 = tpu.reciprocal %91 : vector<8x1xf32> -> vector<8x1xf32>
    %93 = vector.broadcast %92 : vector<8x1xf32> to vector<8x8xf32>
    %94 = arith.mulf %89, %93 : vector<8x8xf32>
    %95 = arith.truncf %94 : vector<8x8xf32> to vector<8x8xbf16>
    %cst_42 = arith.constant dense<0.000000e+00> : vector<8x8xf32>
    %96 = tpu.matmul %95, %83, %cst_42 {dimension_numbers = #tpu.dot_dimension_numbers<[1], [0], [0], [1], [0, 0, 1, 1], [], []>} : vector<8x8xbf16>, vector<8x8xbf16>, vector<8x8xf32> -> vector<8x8xf32>
    %97 = arith.truncf %96 : vector<8x8xf32> to vector<8x8xbf16>
    %c0_43 = arith.constant 0 : index
    %c24 = arith.constant 24 : index
    %98 = vector.load %arg13[%c0_43, %c24] : memref<8x32xbf16, #tpu.memory_space<vmem>>, vector<8x8xbf16>
    tpu.vector_store %arg13[%c0_43, %c24], %97 {strides = array<i32>} : memref<8x32xbf16, #tpu.memory_space<vmem>>, vector<8x8xbf16>,
    %c0_44 = arith.constant 0 : index
    %c0_45 = arith.constant 0 : index
    %99 = vector.load %arg13[%c0_44, %c0_45] : memref<8x32xbf16, #tpu.memory_space<vmem>>, vector<8x32xbf16>
    %c0_46 = arith.constant 0 : index
    %c0_47 = arith.constant 0 : index
    %100 = vector.load %arg7[%c0_46, %c0_47] : memref<32x32xbf16, #tpu.memory_space<vmem>>, vector<32x32xbf16>
    %cst_48 = arith.constant dense<0.000000e+00> : vector<8x32xf32>
    %101 = tpu.matmul %99, %100, %cst_48 {dimension_numbers = #tpu.dot_dimension_numbers<[1], [0], [0], [1], [0, 0, 1, 1], [], []>} : vector<8x32xbf16>, vector<32x32xbf16>, vector<8x32xf32> -> vector<8x32xf32>
    %c0_49 = arith.constant 0 : index
    %c0_50 = arith.constant 0 : index
    %102 = vector.load %arg11[%c0_49, %c0_50] : memref<1x32xf32, #tpu.memory_space<vmem>>, vector<1x32xf32>
    %103 = vector.broadcast %102 : vector<1x32xf32> to vector<8x32xf32>
    %104 = arith.addf %101, %103 : vector<8x32xf32>
    %c0_51 = arith.constant 0 : index
    %c0_52 = arith.constant 0 : index
    %c0_53 = arith.constant 0 : index
    %105 = vector.load %arg12[%c0_51, %c0_52, %c0_53] : memref<1x8x32xf32, #tpu.memory_space<vmem>>, vector<1x8x32xf32>
    %106 = vector.shape_cast %105 : vector<1x8x32xf32> to vector<8x32xf32>
    %107 = vector.shape_cast %104 : vector<8x32xf32> to vector<1x8x32xf32>
    tpu.vector_store %arg12[%c0_51, %c0_52, %c0_53], %107 {strides = array<i32>} : memref<1x8x32xf32, #tpu.memory_space<vmem>>, vector<1x8x32xf32>,
    return
  }
  func.func @transform_0(%arg0: i32) -> (i32, i32, i32) {
    %c0_i32 = arith.constant 0 : i32
    %c0_i32_0 = arith.constant 0 : i32
    %c0_i32_1 = arith.constant 0 : i32
    return %arg0, %c0_i32, %c0_i32_0 : i32, i32, i32
  }
  func.func @transform_1(%arg0: i32) -> (i32, i32, i32) {
    %c0_i32 = arith.constant 0 : i32
    %c0_i32_0 = arith.constant 0 : i32
    %c0_i32_1 = arith.constant 0 : i32
    return %arg0, %c0_i32, %c0_i32_0 : i32, i32, i32
  }
  func.func @transform_2(%arg0: i32) -> (i32, i32, i32) {
    %c0_i32 = arith.constant 0 : i32
    %c0_i32_0 = arith.constant 0 : i32
    %c0_i32_1 = arith.constant 0 : i32
    return %arg0, %c0_i32, %c0_i32_0 : i32, i32, i32
  }
  func.func @transform_3(%arg0: i32) -> (i32, i32) {
    %c0_i32 = arith.constant 0 : i32
    %c0_i32_0 = arith.constant 0 : i32
    %c0_i32_1 = arith.constant 0 : i32
    return %c0_i32, %c0_i32_0 : i32, i32
  }
  func.func @transform_4(%arg0: i32) -> (i32, i32) {
    %c0_i32 = arith.constant 0 : i32
    %c0_i32_0 = arith.constant 0 : i32
    %c0_i32_1 = arith.constant 0 : i32
    return %c0_i32, %c0_i32_0 : i32, i32
  }
  func.func @transform_5(%arg0: i32) -> (i32, i32) {
    %c0_i32 = arith.constant 0 : i32
    %c0_i32_0 = arith.constant 0 : i32
    %c0_i32_1 = arith.constant 0 : i32
    return %c0_i32, %c0_i32_0 : i32, i32
  }
  func.func @transform_6(%arg0: i32) -> (i32, i32) {
    %c0_i32 = arith.constant 0 : i32
    %c0_i32_0 = arith.constant 0 : i32
    %c0_i32_1 = arith.constant 0 : i32
    return %c0_i32, %c0_i32_0 : i32, i32
  }
  func.func @transform_7(%arg0: i32) -> (i32, i32) {
    %c0_i32 = arith.constant 0 : i32
    %c0_i32_0 = arith.constant 0 : i32
    %c0_i32_1 = arith.constant 0 : i32
    return %c0_i32, %c0_i32_0 : i32, i32
  }
  func.func @transform_8(%arg0: i32) -> (i32, i32) {
    %c0_i32 = arith.constant 0 : i32
    %c0_i32_0 = arith.constant 0 : i32
    %c0_i32_1 = arith.constant 0 : i32
    return %c0_i32, %c0_i32_0 : i32, i32
  }
  func.func @transform_9(%arg0: i32) -> (i32, i32) {
    %c0_i32 = arith.constant 0 : i32
    %c0_i32_0 = arith.constant 0 : i32
    %c0_i32_1 = arith.constant 0 : i32
    return %c0_i32, %c0_i32_0 : i32, i32
  }
  func.func @transform_10(%arg0: i32) -> (i32, i32) {
    %c0_i32 = arith.constant 0 : i32
    %c0_i32_0 = arith.constant 0 : i32
    %c0_i32_1 = arith.constant 0 : i32
    return %c0_i32, %c0_i32_0 : i32, i32
  }
  func.func @transform_11(%arg0: i32) -> (i32, i32, i32) {
    %c0_i32 = arith.constant 0 : i32
    %c0_i32_0 = arith.constant 0 : i32
    %c0_i32_1 = arith.constant 0 : i32
    return %arg0, %c0_i32, %c0_i32_0 : i32, i32, i32
  }
}

</mosaic_0001>

<llo_original>
// kernel: tpu_custom_call.1
$region0: #{tpu_custom_call.1}
  #allocation0 [shape = 'u32[]', space=smem, size = 0x4, offset = 0x4, fixed_abs, tag = 'smem constant byte address 0x4 - core index']
  #allocation1 [shape = 'u32[144,128]{1,0:T(1,128)}', space=vmem, size = 0x12000, scoped, tag = 'internal scratch']
  #allocation2 [shape = 'bf16[8,32]{1,0:T(8,128)(2,1)}', space=vmem, size = 0x800, scoped, tag = 'scratch operand']
  %s0 = inlined_call_operand.hbm [shape: bf16[2,8,32], index: 0, kind: input, shape index: {}]
  %s1 = inlined_call_operand.hbm [shape: bf16[2,8,32], index: 1, kind: input, shape index: {}]
  %s2 = inlined_call_operand.hbm [shape: bf16[2,8,32], index: 2, kind: input, shape index: {}]
  %s3 = inlined_call_operand.hbm [shape: bf16[32,32], index: 3, kind: input, shape index: {}]
  %s4 = inlined_call_operand.hbm [shape: bf16[32,32], index: 4, kind: input, shape index: {}]
  %s5 = inlined_call_operand.hbm [shape: bf16[32,32], index: 5, kind: input, shape index: {}]
  %s6 = inlined_call_operand.hbm [shape: bf16[32,32], index: 6, kind: input, shape index: {}]
  %s7 = inlined_call_operand.vmem [shape: f32[1,32], index: 7, kind: input, shape index: {}]
  %s8 = inlined_call_operand.vmem [shape: f32[1,32], index: 8, kind: input, shape index: {}]
  %s9 = inlined_call_operand.vmem [shape: f32[1,32], index: 9, kind: input, shape index: {}]
  %s10 = inlined_call_operand.vmem [shape: f32[1,32], index: 10, kind: input, shape index: {}]
  %s11 = inlined_call_operand.hbm [shape: f32[2,8,32], index: 11, kind: output, shape index: {}]
  %s12 = sld [smem:[#allocation0]]
  $region105: #{tpu_custom_call.1} parent=0
    _
  %s14 = ssub.s32 1, %s12
  %s15 = scalar_select 0, %s14, %s12
  $region1: #{tpu_custom_call.1} parent=0
    #allocation3 [shape = 'u8[4096]{0}', space=vmem, size = 0x1000, scoped, tag = 'input window, operand 0']
    #allocation4 [shape = 's32[2]{0}', space=sflag, size = 0x8, scoped, tag = 'scoped memory for tpu_custom_call.1']
    #allocation5 [shape = 's32[2]{0}', space=sflag, size = 0x8, scoped, tag = 'scoped memory for tpu_custom_call.1']
    #allocation6 [shape = 'u8[4096]{0}', space=vmem, size = 0x1000, scoped, tag = 'input window, operand 1']
    #allocation7 [shape = 's32[2]{0}', space=sflag, size = 0x8, scoped, tag = 'scoped memory for tpu_custom_call.1']
    #allocation8 [shape = 'u8[4096]{0}', space=vmem, size = 0x1000, scoped, tag = 'input window, operand 2']
    #allocation9 [shape = 'u8[8192]{0}', space=vmem, size = 0x2000, scoped, tag = 'input window, operand 3, single buffered']
    #allocation10 [shape = 's32[1]{0}', space=sflag, size = 0x4, scoped, tag = 'scoped memory for tpu_custom_call.1']
    #allocation11 [shape = 'u8[8192]{0}', space=vmem, size = 0x2000, scoped, tag = 'input window, operand 4, single buffered']
    #allocation12 [shape = 'u8[8192]{0}', space=vmem, size = 0x2000, scoped, tag = 'input window, operand 5, single buffered']
    #allocation13 [shape = 's32[1]{0}', space=sflag, size = 0x4, scoped, tag = 'scoped memory for tpu_custom_call.1']
    #allocation14 [shape = 'u8[8192]{0}', space=vmem, size = 0x2000, scoped, tag = 'input window, operand 6, single buffered']
    #allocation15 [shape = 'u8[8192]{0}', space=vmem, size = 0x2000, scoped, tag = 'output window, operand 0']
    %16 = vsyncpa [#allocation4], 0
    %s17 = scalar_lea.sflag [#allocation4], 1
    %18 = vsyncpa %s17, 0
    %19 = vsyncpa [#allocation7], 0
    %s20 = scalar_lea.sflag [#allocation7], 1
    %21 = vsyncpa %s20, 0
    %22 = vsyncpa [#allocation10], 0
    %23 = vsyncpa [#allocation13], 0
    %24 = vsyncpa [#allocation5], 0
    %s25 = scalar_lea.sflag [#allocation5], 1
    %26 = vsyncpa %s25, 0
    loop: start=0, step=1, limit=4
    $region2: #{tpu_custom_call.1} parent=1 // loop_pre_header
      _
    $region3: #{tpu_custom_call.1} parent=1 // loop_header
      %s28 = sphi 0, %s32
      %p29 = scmp.ge.s32.totalorder %s28, 4
      %s38 = sphi 0, %s40
      %s41 = sphi 0, %s38
      %s42 = sphi 0, %s41
      %s58 = sphi 0, %s42
      %s64 = sphi 0, %s66
      %s67 = sphi 0, %s64
      %s68 = sphi 0, %s67
      %s84 = sphi 0, %s68
      %s90 = sphi 0, %s92
      %s93 = sphi 0, %s90
      %s94 = sphi 0, %s93
      %s110 = sphi 0, %s94
      %s114 = sphi 0, %s114
      %s116 = sphi 0, %s114
      %s117 = sphi 0, %s116
      %s131 = sphi 0, %s117
      %s135 = sphi 0, %s135
      %s137 = sphi 0, %s135
      %s138 = sphi 0, %s137
      %s152 = sphi 0, %s138
      %s156 = sphi 0, %s156
      %s158 = sphi 0, %s156
      %s159 = sphi 0, %s158
      %s173 = sphi 0, %s159
      %s177 = sphi 0, %s177
      %s179 = sphi 0, %s177
      %s180 = sphi 0, %s179
      %s194 = sphi 0, %s180
      %s198 = sphi 0, %s198
      %s200 = sphi 0, %s198
      %s201 = sphi 0, %s200
      %s215 = sphi 0, %s201
      %s219 = sphi 0, %s219
      %s221 = sphi 0, %s219
      %s222 = sphi 0, %s221
      %s236 = sphi 0, %s222
      %s240 = sphi 0, %s240
      %s242 = sphi 0, %s240
      %s243 = sphi 0, %s242
      %s257 = sphi 0, %s243
      %s261 = sphi 0, %s261
      %s263 = sphi 0, %s261
      %s264 = sphi 0, %s263
      %s278 = sphi 0, %s264
      %s284 = sphi 0, %s286
      %s287 = sphi 0, %s284
      %s288 = sphi 0, %s287
      %s304 = sphi 0, %s288
    $region4: #{tpu_custom_call.1} parent=1 // loop_header_branch
      %31 = sbr.rel (%p29) target = $region8
    $region5: #{tpu_custom_call.1} parent=1 // loop_body
      %s33 = ssub.s32 %s28, 1
      %s34 = ssub.s32 %s28, 2
      %s35 = sadd.s32 %s28, 1
      %s36 = ssub.s32 %s28, %s35
      %p37 = scmp.eq.s32.totalorder %s36, 0
      %s39 = sadd.s32 %s38, 1
      %s40 = scalar_select %p37, %s38, %s39
      %p43 = pneg %p37
      %p44 = scmp.eq.s32.totalorder %s28, 1
      %p45 = por %p43, %p44
      %p46 = scmp.ne.s32.totalorder %s38, %s41
      %p47 = scmp.eq.s32.totalorder %s28, 0
      %p48 = por %p46, %p47
      %p49 = scmp.ne.s32.totalorder %s38, %s41
      %p50 = scmp.eq.s32.totalorder %s33, 1
      %p51 = por %p49, %p50
      %p52 = scmp.ne.s32.totalorder %s41, %s42
      %p53 = scmp.eq.s32.totalorder %s33, 0
      %p54 = por %p52, %p53
      %p55 = scmp.ne.s32.totalorder %s41, %s42
      %p56 = scmp.eq.s32.totalorder %s34, 1
      %p57 = por %p55, %p56
      %p59 = scmp.ne.s32.totalorder %s42, %s58
      %p60 = scmp.eq.s32.totalorder %s34, 0
      %p61 = por %p59, %p60
      %s62 = ssub.s32 %s28, %s35
      %p63 = scmp.eq.s32.totalorder %s62, 0
      %s65 = sadd.s32 %s64, 1
      %s66 = scalar_select %p63, %s64, %s65
      %p69 = pneg %p63
      %p70 = scmp.eq.s32.totalorder %s28, 1
      %p71 = por %p69, %p70
      %p72 = scmp.ne.s32.totalorder %s64, %s67
      %p73 = scmp.eq.s32.totalorder %s28, 0
      %p74 = por %p72, %p73
      %p75 = scmp.ne.s32.totalorder %s64, %s67
      %p76 = scmp.eq.s32.totalorder %s33, 1
      %p77 = por %p75, %p76
      %p78 = scmp.ne.s32.totalorder %s67, %s68
      %p79 = scmp.eq.s32.totalorder %s33, 0
      %p80 = por %p78, %p79
      %p81 = scmp.ne.s32.totalorder %s67, %s68
      %p82 = scmp.eq.s32.totalorder %s34, 1
      %p83 = por %p81, %p82
      %p85 = scmp.ne.s32.totalorder %s68, %s84
      %p86 = scmp.eq.s32.totalorder %s34, 0
      %p87 = por %p85, %p86
      %s88 = ssub.s32 %s28, %s35
      %p89 = scmp.eq.s32.totalorder %s88, 0
      %s91 = sadd.s32 %s90, 1
      %s92 = scalar_select %p89, %s90, %s91
      %p95 = pneg %p89
      %p96 = scmp.eq.s32.totalorder %s28, 1
      %p97 = por %p95, %p96
      %p98 = scmp.ne.s32.totalorder %s90, %s93
      %p99 = scmp.eq.s32.totalorder %s28, 0
      %p100 = por %p98, %p99
      %p101 = scmp.ne.s32.totalorder %s90, %s93
      %p102 = scmp.eq.s32.totalorder %s33, 1
      %p103 = por %p101, %p102
      %p104 = scmp.ne.s32.totalorder %s93, %s94
      %p105 = scmp.eq.s32.totalorder %s33, 0
      %p106 = por %p104, %p105
      %p107 = scmp.ne.s32.totalorder %s93, %s94
      %p108 = scmp.eq.s32.totalorder %s34, 1
      %p109 = por %p107, %p108
      %p111 = scmp.ne.s32.totalorder %s94, %s110
      %p112 = scmp.eq.s32.totalorder %s34, 0
      %p113 = por %p111, %p112
      %s115 = sadd.s32 %s114, 1
      %p118 = scmp.eq.s32.totalorder %s28, 1
      %p119 = scmp.ne.s32.totalorder %s114, %s116
      %p120 = scmp.eq.s32.totalorder %s28, 0
      %p121 = por %p119, %p120
      %p122 = scmp.ne.s32.totalorder %s114, %s116
      %p123 = scmp.eq.s32.totalorder %s33, 1
      %p124 = por %p122, %p123
      %p125 = scmp.ne.s32.totalorder %s116, %s117
      %p126 = scmp.eq.s32.totalorder %s33, 0
      %p127 = por %p125, %p126
      %p128 = scmp.ne.s32.totalorder %s116, %s117
      %p129 = scmp.eq.s32.totalorder %s34, 1
      %p130 = por %p128, %p129
      %p132 = scmp.ne.s32.totalorder %s117, %s131
      %p133 = scmp.eq.s32.totalorder %s34, 0
      %p134 = por %p132, %p133
      %s136 = sadd.s32 %s135, 1
      %p139 = scmp.eq.s32.totalorder %s28, 1
      %p140 = scmp.ne.s32.totalorder %s135, %s137
      %p141 = scmp.eq.s32.totalorder %s28, 0
      %p142 = por %p140, %p141
      %p143 = scmp.ne.s32.totalorder %s135, %s137
      %p144 = scmp.eq.s32.totalorder %s33, 1
      %p145 = por %p143, %p144
      %p146 = scmp.ne.s32.totalorder %s137, %s138
      %p147 = scmp.eq.s32.totalorder %s33, 0
      %p148 = por %p146, %p147
      %p149 = scmp.ne.s32.totalorder %s137, %s138
      %p150 = scmp.eq.s32.totalorder %s34, 1
      %p151 = por %p149, %p150
      %p153 = scmp.ne.s32.totalorder %s138, %s152
      %p154 = scmp.eq.s32.totalorder %s34, 0
      %p155 = por %p153, %p154
      %s157 = sadd.s32 %s156, 1
      %p160 = scmp.eq.s32.totalorder %s28, 1
      %p161 = scmp.ne.s32.totalorder %s156, %s158
      %p162 = scmp.eq.s32.totalorder %s28, 0
      %p163 = por %p161, %p162
      %p164 = scmp.ne.s32.totalorder %s156, %s158
      %p165 = scmp.eq.s32.totalorder %s33, 1
      %p166 = por %p164, %p165
      %p167 = scmp.ne.s32.totalorder %s158, %s159
      %p168 = scmp.eq.s32.totalorder %s33, 0
      %p169 = por %p167, %p168
      %p170 = scmp.ne.s32.totalorder %s158, %s159
      %p171 = scmp.eq.s32.totalorder %s34, 1
      %p172 = por %p170, %p171
      %p174 = scmp.ne.s32.totalorder %s159, %s173
      %p175 = scmp.eq.s32.totalorder %s34, 0
      %p176 = por %p174, %p175
      %s178 = sadd.s32 %s177, 1
      %p181 = scmp.eq.s32.totalorder %s28, 1
      %p182 = scmp.ne.s32.totalorder %s177, %s179
      %p183 = scmp.eq.s32.totalorder %s28, 0
      %p184 = por %p182, %p183
      %p185 = scmp.ne.s32.totalorder %s177, %s179
      %p186 = scmp.eq.s32.totalorder %s33, 1
      %p187 = por %p185, %p186
      %p188 = scmp.ne.s32.totalorder %s179, %s180
      %p189 = scmp.eq.s32.totalorder %s33, 0
      %p190 = por %p188, %p189
      %p191 = scmp.ne.s32.totalorder %s179, %s180
      %p192 = scmp.eq.s32.totalorder %s34, 1
      %p193 = por %p191, %p192
      %p195 = scmp.ne.s32.totalorder %s180, %s194
      %p196 = scmp.eq.s32.totalorder %s34, 0
      %p197 = por %p195, %p196
      %s199 = sadd.s32 %s198, 1
      %p202 = scmp.eq.s32.totalorder %s28, 1
      %p203 = scmp.ne.s32.totalorder %s198, %s200
      %p204 = scmp.eq.s32.totalorder %s28, 0
      %p205 = por %p203, %p204
      %p206 = scmp.ne.s32.totalorder %s198, %s200
      %p207 = scmp.eq.s32.totalorder %s33, 1
      %p208 = por %p206, %p207
      %p209 = scmp.ne.s32.totalorder %s200, %s201
      %p210 = scmp.eq.s32.totalorder %s33, 0
      %p211 = por %p209, %p210
      %p212 = scmp.ne.s32.totalorder %s200, %s201
      %p213 = scmp.eq.s32.totalorder %s34, 1
      %p214 = por %p212, %p213
      %p216 = scmp.ne.s32.totalorder %s201, %s215
      %p217 = scmp.eq.s32.totalorder %s34, 0
      %p218 = por %p216, %p217
      %s220 = sadd.s32 %s219, 1
      %p223 = scmp.eq.s32.totalorder %s28, 1
      %p224 = scmp.ne.s32.totalorder %s219, %s221
      %p225 = scmp.eq.s32.totalorder %s28, 0
      %p226 = por %p224, %p225
      %p227 = scmp.ne.s32.totalorder %s219, %s221
      %p228 = scmp.eq.s32.totalorder %s33, 1
      %p229 = por %p227, %p228
      %p230 = scmp.ne.s32.totalorder %s221, %s222
      %p231 = scmp.eq.s32.totalorder %s33, 0
      %p232 = por %p230, %p231
      %p233 = scmp.ne.s32.totalorder %s221, %s222
      %p234 = scmp.eq.s32.totalorder %s34, 1
      %p235 = por %p233, %p234
      %p237 = scmp.ne.s32.totalorder %s222, %s236
      %p238 = scmp.eq.s32.totalorder %s34, 0
      %p239 = por %p237, %p238
      %s241 = sadd.s32 %s240, 1
      %p244 = scmp.eq.s32.totalorder %s28, 1
      %p245 = scmp.ne.s32.totalorder %s240, %s242
      %p246 = scmp.eq.s32.totalorder %s28, 0
      %p247 = por %p245, %p246
      %p248 = scmp.ne.s32.totalorder %s240, %s242
      %p249 = scmp.eq.s32.totalorder %s33, 1
      %p250 = por %p248, %p249
      %p251 = scmp.ne.s32.totalorder %s242, %s243
      %p252 = scmp.eq.s32.totalorder %s33, 0
      %p253 = por %p251, %p252
      %p254 = scmp.ne.s32.totalorder %s242, %s243
      %p255 = scmp.eq.s32.totalorder %s34, 1
      %p256 = por %p254, %p255
      %p258 = scmp.ne.s32.totalorder %s243, %s257
      %p259 = scmp.eq.s32.totalorder %s34, 0
      %p260 = por %p258, %p259
      %s262 = sadd.s32 %s261, 1
      %p265 = scmp.eq.s32.totalorder %s28, 1
      %p266 = scmp.ne.s32.totalorder %s261, %s263
      %p267 = scmp.eq.s32.totalorder %s28, 0
      %p268 = por %p266, %p267
      %p269 = scmp.ne.s32.totalorder %s261, %s263
      %p270 = scmp.eq.s32.totalorder %s33, 1
      %p271 = por %p269, %p270
      %p272 = scmp.ne.s32.totalorder %s263, %s264
      %p273 = scmp.eq.s32.totalorder %s33, 0
      %p274 = por %p272, %p273
      %p275 = scmp.ne.s32.totalorder %s263, %s264
      %p276 = scmp.eq.s32.totalorder %s34, 1
      %p277 = por %p275, %p276
      %p279 = scmp.ne.s32.totalorder %s264, %s278
      %p280 = scmp.eq.s32.totalorder %s34, 0
      %p281 = por %p279, %p280
      %s282 = ssub.s32 %s28, %s35
      %p283 = scmp.eq.s32.totalorder %s282, 0
      %s285 = sadd.s32 %s284, 1
      %s286 = scalar_select %p283, %s284, %s285
      %p289 = pneg %p283
      %p290 = scmp.eq.s32.totalorder %s28, 1
      %p291 = por %p289, %p290
      %p292 = scmp.ne.s32.totalorder %s284, %s287
      %p293 = scmp.eq.s32.totalorder %s28, 0
      %p294 = por %p292, %p293
      %p295 = scmp.ne.s32.totalorder %s284, %s287
      %p296 = scmp.eq.s32.totalorder %s33, 1
      %p297 = por %p295, %p296
      %p298 = scmp.ne.s32.totalorder %s287, %s288
      %p299 = scmp.eq.s32.totalorder %s33, 0
      %p300 = por %p298, %p299
      %p301 = scmp.ne.s32.totalorder %s287, %s288
      %p302 = scmp.eq.s32.totalorder %s34, 1
      %p303 = por %p301, %p302
      %p305 = scmp.ne.s32.totalorder %s288, %s304
      %p306 = scmp.eq.s32.totalorder %s34, 0
      %p307 = por %p305, %p306
      %p308 = scmp.le.s32.totalorder 1, %s28
      %p309 = scmp.lt.s32.totalorder %s28, 3
      %p310 = pnand %p308, %p309
      %p311 = pneg %p310
      // Predicated region
      $region9: #{tpu_custom_call.1} parent=5 // pred_check
        _
      $region10: #{tpu_custom_call.1} parent=5 // pred_check_branch
        %313 = sbr.rel (%p310) target = $region12
      $region11: #{tpu_custom_call.1} parent=5 // pred_region
        %s314 = ssub.s32 %s28, 1
        // Predicated region
        $region13: #{tpu_custom_call.1} parent=11 // pred_check
          %p315 = pneg %p127
        $region14: #{tpu_custom_call.1} parent=11 // pred_check_branch
          %317 = sbr.rel (%p315) target = $region16
        $region15: #{tpu_custom_call.1} parent=11 // pred_region
          %s319 = ssub.s32 256, 256
          %320 = vsyncadd [#allocation10], %s319
          %s321 = sshll.u32 [#allocation9], 4
          %s322 = int_to_ptr.vmem [resolvable:$true] %s321
          %327 = dma.hbm_to_vmem [thread:$0]  %s3, 256, %s322, [#allocation10], 64, 64, 4
        $region16: #{tpu_custom_call.1} parent=11 // pred_fallthru
          _
        // Predicated region
        $region17: #{tpu_custom_call.1} parent=11 // pred_check
          %p328 = pneg %p148
        $region18: #{tpu_custom_call.1} parent=11 // pred_check_branch
          %330 = sbr.rel (%p328) target = $region20
        $region19: #{tpu_custom_call.1} parent=11 // pred_region
          %s332 = ssub.s32 256, 256
          %333 = vsyncadd [#allocation10], %s332
          %s334 = sshll.u32 [#allocation11], 4
          %s335 = int_to_ptr.vmem [resolvable:$true] %s334
          %340 = dma.hbm_to_vmem [thread:$0]  %s4, 256, %s335, [#allocation10], 64, 64, 4
        $region20: #{tpu_custom_call.1} parent=11 // pred_fallthru
          _
        // Predicated region
        $region21: #{tpu_custom_call.1} parent=11 // pred_check
          %p341 = pneg %p169
        $region22: #{tpu_custom_call.1} parent=11 // pred_check_branch
          %343 = sbr.rel (%p341) target = $region24
        $region23: #{tpu_custom_call.1} parent=11 // pred_region
          %s345 = ssub.s32 256, 256
          %346 = vsyncadd [#allocation13], %s345
          %s347 = sshll.u32 [#allocation12], 4
          %s348 = int_to_ptr.vmem [resolvable:$true] %s347
          %353 = dma.hbm_to_vmem [thread:$0]  %s5, 256, %s348, [#allocation13], 64, 64, 4
        $region24: #{tpu_custom_call.1} parent=11 // pred_fallthru
          _
        // Predicated region
        $region25: #{tpu_custom_call.1} parent=11 // pred_check
          %p354 = pneg %p190
        $region26: #{tpu_custom_call.1} parent=11 // pred_check_branch
          %356 = sbr.rel (%p354) target = $region28
        $region27: #{tpu_custom_call.1} parent=11 // pred_region
          %s358 = ssub.s32 256, 256
          %359 = vsyncadd [#allocation13], %s358
          %s360 = sshll.u32 [#allocation14], 4
          %s361 = int_to_ptr.vmem [resolvable:$true] %s360
          %366 = dma.hbm_to_vmem [thread:$0]  %s6, 256, %s361, [#allocation13], 64, 64, 4
        $region28: #{tpu_custom_call.1} parent=11 // pred_fallthru
          _
        // Predicated region
        $region29: #{tpu_custom_call.1} parent=11 // pred_check
          %p367 = pneg %p211
        $region30: #{tpu_custom_call.1} parent=11 // pred_check_branch
          %369 = sbr.rel (%p367) target = $region32
        $region31: #{tpu_custom_call.1} parent=11 // pred_region
          _
        $region32: #{tpu_custom_call.1} parent=11 // pred_fallthru
          _
        // Predicated region
        $region33: #{tpu_custom_call.1} parent=11 // pred_check
          %p370 = pneg %p232
        $region34: #{tpu_custom_call.1} parent=11 // pred_check_branch
          %372 = sbr.rel (%p370) target = $region36
        $region35: #{tpu_custom_call.1} parent=11 // pred_region
          _
        $region36: #{tpu_custom_call.1} parent=11 // pred_fallthru
          _
        // Predicated region
        $region37: #{tpu_custom_call.1} parent=11 // pred_check
          %p373 = pneg %p253
        $region38: #{tpu_custom_call.1} parent=11 // pred_check_branch
          %375 = sbr.rel (%p373) target = $region40
        $region39: #{tpu_custom_call.1} parent=11 // pred_region
          _
        $region40: #{tpu_custom_call.1} parent=11 // pred_fallthru
          _
        // Predicated region
        $region41: #{tpu_custom_call.1} parent=11 // pred_check
          %p376 = pneg %p274
        $region42: #{tpu_custom_call.1} parent=11 // pred_check_branch
          %378 = sbr.rel (%p376) target = $region44
        $region43: #{tpu_custom_call.1} parent=11 // pred_region
          _
        $region44: #{tpu_custom_call.1} parent=11 // pred_fallthru
          _
      $region12: #{tpu_custom_call.1} parent=5 // pred_fallthru
        _
      %p379 = scmp.lt.s32.totalorder %s28, 2
      // Predicated region
      $region45: #{tpu_custom_call.1} parent=5 // pred_check
        %p380 = pneg %p379
      $region46: #{tpu_custom_call.1} parent=5 // pred_check_branch
        %382 = sbr.rel (%p380) target = $region48
      $region47: #{tpu_custom_call.1} parent=5 // pred_region
        // Predicated region
        $region49: #{tpu_custom_call.1} parent=47 // pred_check
          %p383 = pneg %p48
        $region50: #{tpu_custom_call.1} parent=47 // pred_check_branch
          %385 = sbr.rel (%p383) target = $region52
        $region51: #{tpu_custom_call.1} parent=47 // pred_region
          %s386 = sand.u32 %s38, 1
          %s387 = scalar_lea.sflag [#allocation4], %s386
          %s388 = sand.u32 %s38, 1
          %s389 = smul.addr %s388, 4
          %s390 = scalar_lea.vmem [#allocation3], %s389
          %s392 = ssub.s32 64, 64
          %393 = vsyncadd %s387, %s392
          %s394 = smul.addr %s28, 64
          %s395 = scalar_lea.hbm %s0, %s394
          %s397 = sshll.u32 %s390, 4
          %s398 = int_to_ptr.vmem [resolvable:$true] %s397
          %400 = dma.hbm_to_vmem [thread:$0]  %s395, 64, %s398, %s387
        $region52: #{tpu_custom_call.1} parent=47 // pred_fallthru
          _
        // Predicated region
        $region53: #{tpu_custom_call.1} parent=47 // pred_check
          %p401 = pneg %p74
        $region54: #{tpu_custom_call.1} parent=47 // pred_check_branch
          %403 = sbr.rel (%p401) target = $region56
        $region55: #{tpu_custom_call.1} parent=47 // pred_region
          %s404 = sand.u32 %s28, 1
          %s405 = scalar_lea.sflag [#allocation7], %s404
          %s406 = sand.u32 %s64, 1
          %s407 = smul.addr %s406, 4
          %s408 = scalar_lea.vmem [#allocation6], %s407
          %s410 = ssub.s32 64, 64
          %411 = vsyncadd %s405, %s410
          %s412 = smul.addr %s28, 64
          %s413 = scalar_lea.hbm %s1, %s412
          %s415 = sshll.u32 %s408, 4
          %s416 = int_to_ptr.vmem [resolvable:$true] %s415
          %418 = dma.hbm_to_vmem [thread:$0]  %s413, 64, %s416, %s405
        $region56: #{tpu_custom_call.1} parent=47 // pred_fallthru
          _
        // Predicated region
        $region57: #{tpu_custom_call.1} parent=47 // pred_check
          %p419 = pneg %p100
        $region58: #{tpu_custom_call.1} parent=47 // pred_check_branch
          %421 = sbr.rel (%p419) target = $region60
        $region59: #{tpu_custom_call.1} parent=47 // pred_region
          %s422 = sand.u32 %s28, 1
          %s423 = scalar_lea.sflag [#allocation7], %s422
          %s424 = sand.u32 %s90, 1
          %s425 = smul.addr %s424, 4
          %s426 = scalar_lea.vmem [#allocation8], %s425
          %s428 = ssub.s32 64, 64
          %429 = vsyncadd %s423, %s428
          %s430 = smul.addr %s28, 64
          %s431 = scalar_lea.hbm %s2, %s430
          %s433 = sshll.u32 %s426, 4
          %s434 = int_to_ptr.vmem [resolvable:$true] %s433
          %436 = dma.hbm_to_vmem [thread:$0]  %s431, 64, %s434, %s423
        $region60: #{tpu_custom_call.1} parent=47 // pred_fallthru
          _
      $region48: #{tpu_custom_call.1} parent=5 // pred_fallthru
        _
      %p437 = scmp.le.s32.totalorder 1, %s28
      %p438 = scmp.lt.s32.totalorder %s28, 3
      %p439 = pnand %p437, %p438
      %p440 = pneg %p439
      // Predicated region
      $region61: #{tpu_custom_call.1} parent=5 // pred_check
        _
      $region62: #{tpu_custom_call.1} parent=5 // pred_check_branch
        %442 = sbr.rel (%p439) target = $region64
      $region63: #{tpu_custom_call.1} parent=5 // pred_region
        %s443 = ssub.s32 %s28, 1
        %s444 = sand.u32 %s41, 1
        %s445 = scalar_lea.sflag [#allocation4], %s444
        %s446 = sand.u32 %s41, 1
        %s447 = smul.addr %s446, 4
        %s448 = scalar_lea.vmem [#allocation3], %s447
        // Predicated region
        $region65: #{tpu_custom_call.1} parent=63 // pred_check
          %p449 = pneg %p54
        $region66: #{tpu_custom_call.1} parent=63 // pred_check_branch
          %451 = sbr.rel (%p449) target = $region68
        $region67: #{tpu_custom_call.1} parent=63 // pred_region
          %452 = dma.done %s445, 64
        $region68: #{tpu_custom_call.1} parent=63 // pred_fallthru
          _
        %s453 = sand.u32 %s33, 1
        %s454 = scalar_lea.sflag [#allocation7], %s453
        %s455 = sand.u32 %s67, 1
        %s456 = smul.addr %s455, 4
        %s457 = scalar_lea.vmem [#allocation6], %s456
        // Predicated region
        $region69: #{tpu_custom_call.1} parent=63 // pred_check
          %p458 = pneg %p80
        $region70: #{tpu_custom_call.1} parent=63 // pred_check_branch
          %460 = sbr.rel (%p458) target = $region72
        $region71: #{tpu_custom_call.1} parent=63 // pred_region
          %461 = dma.done %s454, 64
        $region72: #{tpu_custom_call.1} parent=63 // pred_fallthru
          _
        %s462 = sand.u32 %s33, 1
        %s463 = scalar_lea.sflag [#allocation7], %s462
        %s464 = sand.u32 %s93, 1
        %s465 = smul.addr %s464, 4
        %s466 = scalar_lea.vmem [#allocation8], %s465
        // Predicated region
        $region73: #{tpu_custom_call.1} parent=63 // pred_check
          %p467 = pneg %p106
        $region74: #{tpu_custom_call.1} parent=63 // pred_check_branch
          %469 = sbr.rel (%p467) target = $region76
        $region75: #{tpu_custom_call.1} parent=63 // pred_region
          %470 = dma.done %s463, 64
        $region76: #{tpu_custom_call.1} parent=63 // pred_fallthru
          _
        // Predicated region
        $region77: #{tpu_custom_call.1} parent=63 // pred_check
          %p471 = pneg %p127
        $region78: #{tpu_custom_call.1} parent=63 // pred_check_branch
          %473 = sbr.rel (%p471) target = $region80
        $region79: #{tpu_custom_call.1} parent=63 // pred_region
          %474 = dma.done [#allocation10], 256
        $region80: #{tpu_custom_call.1} parent=63 // pred_fallthru
          _
        // Predicated region
        $region81: #{tpu_custom_call.1} parent=63 // pred_check
          %p475 = pneg %p148
        $region82: #{tpu_custom_call.1} parent=63 // pred_check_branch
          %477 = sbr.rel (%p475) target = $region84
        $region83: #{tpu_custom_call.1} parent=63 // pred_region
          %478 = dma.done [#allocation10], 256
        $region84: #{tpu_custom_call.1} parent=63 // pred_fallthru
          _
        // Predicated region
        $region85: #{tpu_custom_call.1} parent=63 // pred_check
          %p479 = pneg %p169
        $region86: #{tpu_custom_call.1} parent=63 // pred_check_branch
          %481 = sbr.rel (%p479) target = $region88
        $region87: #{tpu_custom_call.1} parent=63 // pred_region
          %482 = dma.done [#allocation13], 256
        $region88: #{tpu_custom_call.1} parent=63 // pred_fallthru
          _
        // Predicated region
        $region89: #{tpu_custom_call.1} parent=63 // pred_check
          %p483 = pneg %p190
        $region90: #{tpu_custom_call.1} parent=63 // pred_check_branch
          %485 = sbr.rel (%p483) target = $region92
        $region91: #{tpu_custom_call.1} parent=63 // pred_region
          %486 = dma.done [#allocation13], 256
        $region92: #{tpu_custom_call.1} parent=63 // pred_fallthru
          _
        %s487 = sand.u32 %s41, 1
        %s488 = scalar_lea.sflag [#allocation4], %s487
        %s489 = sand.u32 %s41, 1
        %s490 = smul.addr %s489, 4
        %s491 = scalar_lea.vmem [#allocation3], %s490
        %p492 = pneg %p54
        %p493 = pneg %p51
        %s494 = sand.u32 %s33, 1
        %s495 = scalar_lea.sflag [#allocation7], %s494
        %s496 = sand.u32 %s67, 1
        %s497 = smul.addr %s496, 4
        %s498 = scalar_lea.vmem [#allocation6], %s497
        %p499 = pneg %p80
        %p500 = pneg %p77
        %s501 = sand.u32 %s33, 1
        %s502 = scalar_lea.sflag [#allocation7], %s501
        %s503 = sand.u32 %s93, 1
        %s504 = smul.addr %s503, 4
        %s505 = scalar_lea.vmem [#allocation8], %s504
        %p506 = pneg %p106
        %p507 = pneg %p103
        %p508 = pneg %p127
        %p509 = pneg %p124
        %p510 = pneg %p148
        %p511 = pneg %p145
        %p512 = pneg %p169
        %p513 = pneg %p166
        %p514 = pneg %p190
        %p515 = pneg %p187
        %p516 = pneg %p211
        %p517 = pneg %p208
        %p518 = pneg %p232
        %p519 = pneg %p229
        %p520 = pneg %p253
        %p521 = pneg %p250
        %p522 = pneg %p274
        %p523 = pneg %p271
        %p524 = pneg %p300
        %p525 = pneg %p297
        %s526 = sand.u32 %s287, 1
        %s527 = scalar_lea.sflag [#allocation5], %s526
        %s528 = sand.u32 %s287, 1
        %s529 = smul.addr %s528, 8
        %s530 = scalar_lea.vmem [#allocation15], %s529
        %v532 = vld [vmem:[%s448] sm:$0xf]
        %v533 = vld [vmem:[%s457] sm:$0xf]
        %v534 = vld [vmem:[%s466] sm:$0xf]
        %v535 = vld [vmem:[#allocation9] sm:$0xf]
        %v536 = vld [vmem:[#allocation9 + $0x4] sm:$0xf]
        %v537 = vld [vmem:[#allocation9 + $0x8] sm:$0xf]
        %v538 = vld [vmem:[#allocation9 + $0xc] sm:$0xf]
        %v539 = vld [vmem:[%s7] sm:$0x1]
        %v541 = vlaneseq
        %v542 = vshrl.u32 %v541, 7
        %v543 = vsub.s32 0, %v542
        %v544 = vrot.slane %v539, %v543
        %v550 = vunpack.c.l.b16 %v535
        %v551 = vunpack.c.l.b16 %v536
        %v552 = vunpack.c.l.b16 %v537
        %v553 = vunpack.c.l.b16 %v538
        %v554 = vpack.c.b16 %v551, %v550
        %v555 = vpack.c.b16 %v553, %v552
        %vm558 = vcmask 261120
        %v560 = vsel %vm558, %v532, 0
        %562 = vmatprep.subr.bf16.mxu0 0
        %563 = vmatpush1.bf16.msra.mxu0 0
        %564 = vmatprep.subr.bf16.mxu0 0
        %565 = vmatpush1.bf16.msra.mxu0 0
        %566 = vmatprep.subr.bf16.mxu0 0
        %567 = vmatpush1.bf16.msra.mxu0 0
        %568 = vmatprep.subr.bf16.mxu0 0
        %569 = vmatpush1.bf16.msra.mxu0 0
        %570 = vmatprep.subr.bf16.mxu0 0
        %571 = vmatpush1.bf16.msra.mxu0 0
        %572 = vmatprep.subr.bf16.mxu0 0
        %573 = vmatpush1.bf16.msra.mxu0 0
        %574 = vmatprep.subr.bf16.mxu0 0
        %575 = vmatpush1.bf16.msra.mxu0 %v555
        %576 = vmatprep.subr.bf16.mxu0 0
        %577 = vmatpush1.bf16.msra.mxu0 %v554
        %578 = vmatprep.subr.bf16.mxu0 0
        %579 = vmatpush2.bf16.msra.mxu0 0
        %580 = vmatprep.subr.bf16.mxu0 0
        %581 = vmatpush2.bf16.msra.mxu0 0
        %582 = vmatprep.subr.bf16.mxu0 0
        %583 = vmatpush2.bf16.msra.mxu0 0
        %584 = vmatprep.subr.bf16.mxu0 0
        %585 = vmatpush2.bf16.msra.mxu0 0
        %586 = vmatprep.subr.bf16.mxu0 0
        %587 = vmatpush2.bf16.msra.mxu0 0
        %588 = vmatprep.subr.bf16.mxu0 0
        %589 = vmatpush2.bf16.msra.mxu0 0
        %590 = vmatprep.subr.bf16.mxu0 0
        %591 = vmatpush2.bf16.msra.mxu0 0
        %592 = vmatprep.subr.bf16.mxu0 0
        %593 = vmatpush2.bf16.msra.mxu0 0
        %594 = vmatprep.mubr.bf16.mxu0 0
        %595 = vmatmul.mubr.bf16.gmra.mxu0 %v560
        %v596 = vpop.f32.mrf.mxu0
        %v597 = vadd.f32 %v544, %v596
        %v598 = vpop.f32.mrf.mxu0
        %v599 = vpop.f32.mrf.mxu0
        %v600 = vpop.f32.mrf.mxu0
        %601 = vdwg.mxu0
        %v602 = vld [vmem:[#allocation11] sm:$0xf]
        %v603 = vld [vmem:[#allocation11 + $0x4] sm:$0xf]
        %v604 = vld [vmem:[#allocation11 + $0x8] sm:$0xf]
        %v605 = vld [vmem:[#allocation11 + $0xc] sm:$0xf]
        %v606 = vld [vmem:[%s8] sm:$0x1]
        %v608 = vlaneseq
        %v609 = vshrl.u32 %v608, 7
        %v610 = vsub.s32 0, %v609
        %v611 = vrot.slane %v606, %v610
        %v617 = vunpack.c.l.b16 %v602
        %v618 = vunpack.c.l.b16 %v603
        %v619 = vunpack.c.l.b16 %v604
        %v620 = vunpack.c.l.b16 %v605
        %v621 = vpack.c.b16 %v618, %v617
        %v622 = vpack.c.b16 %v620, %v619
        %v626 = vsel %vm558, %v533, 0
        %628 = vmatprep.subr.bf16.mxu0 0
        %629 = vmatpush1.bf16.msra.mxu0 0
        %630 = vmatprep.subr.bf16.mxu0 0
        %631 = vmatpush1.bf16.msra.mxu0 0
        %632 = vmatprep.subr.bf16.mxu0 0
        %633 = vmatpush1.bf16.msra.mxu0 0
        %634 = vmatprep.subr.bf16.mxu0 0
        %635 = vmatpush1.bf16.msra.mxu0 0
        %636 = vmatprep.subr.bf16.mxu0 0
        %637 = vmatpush1.bf16.msra.mxu0 0
        %638 = vmatprep.subr.bf16.mxu0 0
        %639 = vmatpush1.bf16.msra.mxu0 0
        %640 = vmatprep.subr.bf16.mxu0 0
        %641 = vmatpush1.bf16.msra.mxu0 %v622
        %642 = vmatprep.subr.bf16.mxu0 0
        %643 = vmatpush1.bf16.msra.mxu0 %v621
        %644 = vmatprep.subr.bf16.mxu0 0
        %645 = vmatpush2.bf16.msra.mxu0 0
        %646 = vmatprep.subr.bf16.mxu0 0
        %647 = vmatpush2.bf16.msra.mxu0 0
        %648 = vmatprep.subr.bf16.mxu0 0
        %649 = vmatpush2.bf16.msra.mxu0 0
        %650 = vmatprep.subr.bf16.mxu0 0
        %651 = vmatpush2.bf16.msra.mxu0 0
        %652 = vmatprep.subr.bf16.mxu0 0
        %653 = vmatpush2.bf16.msra.mxu0 0
        %654 = vmatprep.subr.bf16.mxu0 0
        %655 = vmatpush2.bf16.msra.mxu0 0
        %656 = vmatprep.subr.bf16.mxu0 0
        %657 = vmatpush2.bf16.msra.mxu0 0
        %658 = vmatprep.subr.bf16.mxu0 0
        %659 = vmatpush2.bf16.msra.mxu0 0
        %660 = vmatprep.mubr.bf16.mxu0 0
        %661 = vmatmul.mubr.bf16.gmra.mxu0 %v626
        %v662 = vpop.f32.mrf.mxu0
        %v663 = vadd.f32 %v611, %v662
        %v664 = vpop.f32.mrf.mxu0
        %v665 = vpop.f32.mrf.mxu0
        %v666 = vpop.f32.mrf.mxu0
        %667 = vdwg.mxu0
        %v668 = vld [vmem:[#allocation12] sm:$0xf]
        %v669 = vld [vmem:[#allocation12 + $0x4] sm:$0xf]
        %v670 = vld [vmem:[#allocation12 + $0x8] sm:$0xf]
        %v671 = vld [vmem:[#allocation12 + $0xc] sm:$0xf]
        %v672 = vld [vmem:[%s9] sm:$0x1]
        %v674 = vlaneseq
        %v675 = vshrl.u32 %v674, 7
        %v676 = vsub.s32 0, %v675
        %v677 = vrot.slane %v672, %v676
        %v683 = vunpack.c.l.b16 %v668
        %v684 = vunpack.c.l.b16 %v669
        %v685 = vunpack.c.l.b16 %v670
        %v686 = vunpack.c.l.b16 %v671
        %v687 = vpack.c.b16 %v684, %v683
        %v688 = vpack.c.b16 %v686, %v685
        %v692 = vsel %vm558, %v534, 0
        %694 = vmatprep.subr.bf16.mxu0 0
        %695 = vmatpush1.bf16.msra.mxu0 0
        %696 = vmatprep.subr.bf16.mxu0 0
        %697 = vmatpush1.bf16.msra.mxu0 0
        %698 = vmatprep.subr.bf16.mxu0 0
        %699 = vmatpush1.bf16.msra.mxu0 0
        %700 = vmatprep.subr.bf16.mxu0 0
        %701 = vmatpush1.bf16.msra.mxu0 0
        %702 = vmatprep.subr.bf16.mxu0 0
        %703 = vmatpush1.bf16.msra.mxu0 0
        %704 = vmatprep.subr.bf16.mxu0 0
        %705 = vmatpush1.bf16.msra.mxu0 0
        %706 = vmatprep.subr.bf16.mxu0 0
        %707 = vmatpush1.bf16.msra.mxu0 %v688
        %708 = vmatprep.subr.bf16.mxu0 0
        %709 = vmatpush1.bf16.msra.mxu0 %v687
        %710 = vmatprep.subr.bf16.mxu0 0
        %711 = vmatpush2.bf16.msra.mxu0 0
        %712 = vmatprep.subr.bf16.mxu0 0
        %713 = vmatpush2.bf16.msra.mxu0 0
        %714 = vmatprep.subr.bf16.mxu0 0
        %715 = vmatpush2.bf16.msra.mxu0 0
        %716 = vmatprep.subr.bf16.mxu0 0
        %717 = vmatpush2.bf16.msra.mxu0 0
        %718 = vmatprep.subr.bf16.mxu0 0
        %719 = vmatpush2.bf16.msra.mxu0 0
        %720 = vmatprep.subr.bf16.mxu0 0
        %721 = vmatpush2.bf16.msra.mxu0 0
        %722 = vmatprep.subr.bf16.mxu0 0
        %723 = vmatpush2.bf16.msra.mxu0 0
        %724 = vmatprep.subr.bf16.mxu0 0
        %725 = vmatpush2.bf16.msra.mxu0 0
        %726 = vmatprep.mubr.bf16.mxu0 0
        %727 = vmatmul.mubr.bf16.gmra.mxu0 %v692
        %v728 = vpop.f32.mrf.mxu0
        %v729 = vadd.f32 %v677, %v728
        %v730 = vpop.f32.mrf.mxu0
        %v731 = vpop.f32.mrf.mxu0
        %v732 = vpop.f32.mrf.mxu0
        %733 = vdwg.mxu0
        %v734 = vmul.f32 %v597, 0.35355338
        %v735 = vpack.c.bf16 %v734, %v734
        %v736 = vpack.c.bf16 %v663, %v663
        %v737 = vpack.c.bf16 %v729, %v729
        %vm738 = vcmask 64512
        %v740 = vsel %vm738, %v735, 0
        %v743 = vsel %vm738, %v736, 0
        %745 = vmatprep.subr.bf16.mxu0 0
        %746 = vmatpush1.bf16.xpose.msra.mxu0 0
        %747 = vmatprep.subr.bf16.mxu0 0
        %748 = vmatpush1.bf16.xpose.msra.mxu0 0
        %749 = vmatprep.subr.bf16.mxu0 0
        %750 = vmatpush1.bf16.xpose.msra.mxu0 0
        %751 = vmatprep.subr.bf16.mxu0 0
        %752 = vmatpush1.bf16.xpose.msra.mxu0 0
        %753 = vmatprep.subr.bf16.mxu0 0
        %754 = vmatpush1.bf16.xpose.msra.mxu0 0
        %755 = vmatprep.subr.bf16.mxu0 0
        %756 = vmatpush1.bf16.xpose.msra.mxu0 0
        %757 = vmatprep.subr.bf16.mxu0 0
        %758 = vmatpush1.bf16.xpose.msra.mxu0 0
        %759 = vmatprep.subr.bf16.mxu0 0
        %760 = vmatpush1.bf16.xpose.msra.mxu0 %v743
        %761 = vmatprep.subr.bf16.mxu0 0
        %762 = vmatpush2.bf16.xpose.msra.mxu0 0
        %763 = vmatprep.subr.bf16.mxu0 0
        %764 = vmatpush2.bf16.xpose.msra.mxu0 0
        %765 = vmatprep.subr.bf16.mxu0 0
        %766 = vmatpush2.bf16.xpose.msra.mxu0 0
        %767 = vmatprep.subr.bf16.mxu0 0
        %768 = vmatpush2.bf16.xpose.msra.mxu0 0
        %769 = vmatprep.subr.bf16.mxu0 0
        %770 = vmatpush2.bf16.xpose.msra.mxu0 0
        %771 = vmatprep.subr.bf16.mxu0 0
        %772 = vmatpush2.bf16.xpose.msra.mxu0 0
        %773 = vmatprep.subr.bf16.mxu0 0
        %774 = vmatpush2.bf16.xpose.msra.mxu0 0
        %775 = vmatprep.subr.bf16.mxu0 0
        %776 = vmatpush2.bf16.xpose.msra.mxu0 0
        %777 = vmatprep.mubr.bf16.mxu0 0
        %778 = vmatmul.mubr.bf16.gmra.mxu0 %v740
        %v779 = vpop.f32.mrf.mxu0
        %v780 = vadd.f32 0.0, %v779
        %v781 = vpop.f32.mrf.mxu0
        %v782 = vpop.f32.mrf.mxu0
        %v783 = vpop.f32.mrf.mxu0
        %784 = vdwg.mxu0
        %v785 = vsel %vm738, %v780, -inf
        %786 = vmax.xlane.f32.xlu0 %v785
        %v787 = vpop.xlane.xlu0 %786
        %v788 = vsub.f32 %v780, %v787
        %v789 = vmul.f32 %v788, 1.442695
        %v790 = vpow.pop %v789
        %v791 = vsel %vm738, %v790, 0.0
        %792 = vadd.xlane.f32.xlu0 %v791
        %v793 = vpop.xlane.xlu0 %792
        %v794 = vrcp.pop %v793
        %v795 = vmul.f32 %v790, %v794
        %v796 = vpack.c.bf16 %v795, %v795
        %v798 = vsel %vm738, %v796, 0
        %vm800 = vcmask 1043456
        %v802 = vsel %vm800, %v737, 0
        %804 = vmatprep.subr.bf16.mxu0 0
        %805 = vmatpush1.bf16.msra.mxu0 0
        %806 = vmatprep.subr.bf16.mxu0 0
        %807 = vmatpush1.bf16.msra.mxu0 0
        %808 = vmatprep.subr.bf16.mxu0 0
        %809 = vmatpush1.bf16.msra.mxu0 0
        %810 = vmatprep.subr.bf16.mxu0 0
        %811 = vmatpush1.bf16.msra.mxu0 0
        %812 = vmatprep.subr.bf16.mxu0 0
        %813 = vmatpush1.bf16.msra.mxu0 0
        %814 = vmatprep.subr.bf16.mxu0 0
        %815 = vmatpush1.bf16.msra.mxu0 0
        %816 = vmatprep.subr.bf16.mxu0 0
        %817 = vmatpush1.bf16.msra.mxu0 0
        %818 = vmatprep.subr.bf16.mxu0 0
        %819 = vmatpush1.bf16.msra.mxu0 %v802
        %820 = vmatprep.subr.bf16.mxu0 0
        %821 = vmatpush2.bf16.msra.mxu0 0
        %822 = vmatprep.subr.bf16.mxu0 0
        %823 = vmatpush2.bf16.msra.mxu0 0
        %824 = vmatprep.subr.bf16.mxu0 0
        %825 = vmatpush2.bf16.msra.mxu0 0
        %826 = vmatprep.subr.bf16.mxu0 0
        %827 = vmatpush2.bf16.msra.mxu0 0
        %828 = vmatprep.subr.bf16.mxu0 0
        %829 = vmatpush2.bf16.msra.mxu0 0
        %830 = vmatprep.subr.bf16.mxu0 0
        %831 = vmatpush2.bf16.msra.mxu0 0
        %832 = vmatprep.subr.bf16.mxu0 0
        %833 = vmatpush2.bf16.msra.mxu0 0
        %834 = vmatprep.subr.bf16.mxu0 0
        %835 = vmatpush2.bf16.msra.mxu0 0
        %836 = vmatprep.mubr.bf16.mxu0 0
        %837 = vmatmul.mubr.bf16.gmra.mxu0 %v798
        %v838 = vpop.f32.mrf.mxu0
        %v839 = vadd.f32 0.0, %v838
        %v840 = vpop.f32.mrf.mxu0
        %v841 = vpop.f32.mrf.mxu0
        %v842 = vpop.f32.mrf.mxu0
        %843 = vdwg.mxu0
        %v844 = vpack.c.bf16 %v839, %v839
        %vm845 = vcmask 60416
        %846 = vst.msk [vmem:[#allocation2] sm:$0xf] %vm845, %v844
        %848 = vrot.lane.b32.xlu0 %v735, 120
        %v849 = vpop.permute.xlu0 %848
        %851 = vrot.lane.b32.xlu0 %v736, 120
        %v852 = vpop.permute.xlu0 %851
        %v854 = vsel %vm738, %v849, 0
        %v857 = vsel %vm738, %v852, 0
        %859 = vmatprep.subr.bf16.mxu0 0
        %860 = vmatpush1.bf16.xpose.msra.mxu0 0
        %861 = vmatprep.subr.bf16.mxu0 0
        %862 = vmatpush1.bf16.xpose.msra.mxu0 0
        %863 = vmatprep.subr.bf16.mxu0 0
        %864 = vmatpush1.bf16.xpose.msra.mxu0 0
        %865 = vmatprep.subr.bf16.mxu0 0
        %866 = vmatpush1.bf16.xpose.msra.mxu0 0
        %867 = vmatprep.subr.bf16.mxu0 0
        %868 = vmatpush1.bf16.xpose.msra.mxu0 0
        %869 = vmatprep.subr.bf16.mxu0 0
        %870 = vmatpush1.bf16.xpose.msra.mxu0 0
        %871 = vmatprep.subr.bf16.mxu0 0
        %872 = vmatpush1.bf16.xpose.msra.mxu0 0
        %873 = vmatprep.subr.bf16.mxu0 0
        %874 = vmatpush1.bf16.xpose.msra.mxu0 %v857
        %875 = vmatprep.subr.bf16.mxu0 0
        %876 = vmatpush2.bf16.xpose.msra.mxu0 0
        %877 = vmatprep.subr.bf16.mxu0 0
        %878 = vmatpush2.bf16.xpose.msra.mxu0 0
        %879 = vmatprep.subr.bf16.mxu0 0
        %880 = vmatpush2.bf16.xpose.msra.mxu0 0
        %881 = vmatprep.subr.bf16.mxu0 0
        %882 = vmatpush2.bf16.xpose.msra.mxu0 0
        %883 = vmatprep.subr.bf16.mxu0 0
        %884 = vmatpush2.bf16.xpose.msra.mxu0 0
        %885 = vmatprep.subr.bf16.mxu0 0
        %886 = vmatpush2.bf16.xpose.msra.mxu0 0
        %887 = vmatprep.subr.bf16.mxu0 0
        %888 = vmatpush2.bf16.xpose.msra.mxu0 0
        %889 = vmatprep.subr.bf16.mxu0 0
        %890 = vmatpush2.bf16.xpose.msra.mxu0 0
        %891 = vmatprep.mubr.bf16.mxu0 0
        %892 = vmatmul.mubr.bf16.gmra.mxu0 %v854
        %v893 = vpop.f32.mrf.mxu0
        %v894 = vadd.f32 0.0, %v893
        %v895 = vpop.f32.mrf.mxu0
        %v896 = vpop.f32.mrf.mxu0
        %v897 = vpop.f32.mrf.mxu0
        %898 = vdwg.mxu0
        %v899 = vsel %vm738, %v894, -inf
        %900 = vmax.xlane.f32.xlu0 %v899
        %v901 = vpop.xlane.xlu0 %900
        %v902 = vsub.f32 %v894, %v901
        %v903 = vmul.f32 %v902, 1.442695
        %v904 = vpow.pop %v903
        %v905 = vsel %vm738, %v904, 0.0
        %906 = vadd.xlane.f32.xlu0 %v905
        %v907 = vpop.xlane.xlu0 %906
        %v908 = vrcp.pop %v907
        %v909 = vmul.f32 %v904, %v908
        %v910 = vpack.c.bf16 %v909, %v909
        %912 = vrot.lane.b32.xlu0 %v737, 120
        %v913 = vpop.permute.xlu0 %912
        %v915 = vsel %vm738, %v910, 0
        %v918 = vsel %vm800, %v913, 0
        %920 = vmatprep.subr.bf16.mxu0 0
        %921 = vmatpush1.bf16.msra.mxu0 0
        %922 = vmatprep.subr.bf16.mxu0 0
        %923 = vmatpush1.bf16.msra.mxu0 0
        %924 = vmatprep.subr.bf16.mxu0 0
        %925 = vmatpush1.bf16.msra.mxu0 0
        %926 = vmatprep.subr.bf16.mxu0 0
        %927 = vmatpush1.bf16.msra.mxu0 0
        %928 = vmatprep.subr.bf16.mxu0 0
        %929 = vmatpush1.bf16.msra.mxu0 0
        %930 = vmatprep.subr.bf16.mxu0 0
        %931 = vmatpush1.bf16.msra.mxu0 0
        %932 = vmatprep.subr.bf16.mxu0 0
        %933 = vmatpush1.bf16.msra.mxu0 0
        %934 = vmatprep.subr.bf16.mxu0 0
        %935 = vmatpush1.bf16.msra.mxu0 %v918
        %936 = vmatprep.subr.bf16.mxu0 0
        %937 = vmatpush2.bf16.msra.mxu0 0
        %938 = vmatprep.subr.bf16.mxu0 0
        %939 = vmatpush2.bf16.msra.mxu0 0
        %940 = vmatprep.subr.bf16.mxu0 0
        %941 = vmatpush2.bf16.msra.mxu0 0
        %942 = vmatprep.subr.bf16.mxu0 0
        %943 = vmatpush2.bf16.msra.mxu0 0
        %944 = vmatprep.subr.bf16.mxu0 0
        %945 = vmatpush2.bf16.msra.mxu0 0
        %946 = vmatprep.subr.bf16.mxu0 0
        %947 = vmatpush2.bf16.msra.mxu0 0
        %948 = vmatprep.subr.bf16.mxu0 0
        %949 = vmatpush2.bf16.msra.mxu0 0
        %950 = vmatprep.subr.bf16.mxu0 0
        %951 = vmatpush2.bf16.msra.mxu0 0
        %952 = vmatprep.mubr.bf16.mxu0 0
        %953 = vmatmul.mubr.bf16.gmra.mxu0 %v915
        %v954 = vpop.f32.mrf.mxu0
        %v955 = vadd.f32 0.0, %v954
        %v956 = vpop.f32.mrf.mxu0
        %v957 = vpop.f32.mrf.mxu0
        %v958 = vpop.f32.mrf.mxu0
        %959 = vdwg.mxu0
        %v960 = vpack.c.bf16 %v955, %v955
        %v962 = vunpack.c.l.b16 %v960
        %v963 = vpack.c.b16 %v962, %v962
        %964 = vrot.lane.b32.xlu0 %v963, 8
        %v965 = vpop.permute.xlu0 %964
        %vm967 = vcmask 126016
        %968 = vst.msk [vmem:[#allocation2] sm:$0xf] %vm967, %v965
        %969 = vrot.lane.b32.xlu0 %v735, 112
        %v970 = vpop.permute.xlu0 %969
        %971 = vrot.lane.b32.xlu0 %v736, 112
        %v972 = vpop.permute.xlu0 %971
        %v974 = vsel %vm738, %v970, 0
        %v977 = vsel %vm738, %v972, 0
        %979 = vmatprep.subr.bf16.mxu0 0
        %980 = vmatpush1.bf16.xpose.msra.mxu0 0
        %981 = vmatprep.subr.bf16.mxu0 0
        %982 = vmatpush1.bf16.xpose.msra.mxu0 0
        %983 = vmatprep.subr.bf16.mxu0 0
        %984 = vmatpush1.bf16.xpose.msra.mxu0 0
        %985 = vmatprep.subr.bf16.mxu0 0
        %986 = vmatpush1.bf16.xpose.msra.mxu0 0
        %987 = vmatprep.subr.bf16.mxu0 0
        %988 = vmatpush1.bf16.xpose.msra.mxu0 0
        %989 = vmatprep.subr.bf16.mxu0 0
        %990 = vmatpush1.bf16.xpose.msra.mxu0 0
        %991 = vmatprep.subr.bf16.mxu0 0
        %992 = vmatpush1.bf16.xpose.msra.mxu0 0
        %993 = vmatprep.subr.bf16.mxu0 0
        %994 = vmatpush1.bf16.xpose.msra.mxu0 %v977
        %995 = vmatprep.subr.bf16.mxu0 0
        %996 = vmatpush2.bf16.xpose.msra.mxu0 0
        %997 = vmatprep.subr.bf16.mxu0 0
        %998 = vmatpush2.bf16.xpose.msra.mxu0 0
        %999 = vmatprep.subr.bf16.mxu0 0
        %1000 = vmatpush2.bf16.xpose.msra.mxu0 0
        %1001 = vmatprep.subr.bf16.mxu0 0
        %1002 = vmatpush2.bf16.xpose.msra.mxu0 0
        %1003 = vmatprep.subr.bf16.mxu0 0
        %1004 = vmatpush2.bf16.xpose.msra.mxu0 0
        %1005 = vmatprep.subr.bf16.mxu0 0
        %1006 = vmatpush2.bf16.xpose.msra.mxu0 0
        %1007 = vmatprep.subr.bf16.mxu0 0
        %1008 = vmatpush2.bf16.xpose.msra.mxu0 0
        %1009 = vmatprep.subr.bf16.mxu0 0
        %1010 = vmatpush2.bf16.xpose.msra.mxu0 0
        %1011 = vmatprep.mubr.bf16.mxu0 0
        %1012 = vmatmul.mubr.bf16.gmra.mxu0 %v974
        %v1013 = vpop.f32.mrf.mxu0
        %v1014 = vadd.f32 0.0, %v1013
        %v1015 = vpop.f32.mrf.mxu0
        %v1016 = vpop.f32.mrf.mxu0
        %v1017 = vpop.f32.mrf.mxu0
        %1018 = vdwg.mxu0
        %v1019 = vsel %vm738, %v1014, -inf
        %1020 = vmax.xlane.f32.xlu0 %v1019
        %v1021 = vpop.xlane.xlu0 %1020
        %v1022 = vsub.f32 %v1014, %v1021
        %v1023 = vmul.f32 %v1022, 1.442695
        %v1024 = vpow.pop %v1023
        %v1025 = vsel %vm738, %v1024, 0.0
        %1026 = vadd.xlane.f32.xlu0 %v1025
        %v1027 = vpop.xlane.xlu0 %1026
        %v1028 = vrcp.pop %v1027
        %v1029 = vmul.f32 %v1024, %v1028
        %v1030 = vpack.c.bf16 %v1029, %v1029
        %1031 = vrot.lane.b32.xlu0 %v737, 112
        %v1032 = vpop.permute.xlu0 %1031
        %v1034 = vsel %vm738, %v1030, 0
        %v1037 = vsel %vm800, %v1032, 0
        %1039 = vmatprep.subr.bf16.mxu0 0
        %1040 = vmatpush1.bf16.msra.mxu0 0
        %1041 = vmatprep.subr.bf16.mxu0 0
        %1042 = vmatpush1.bf16.msra.mxu0 0
        %1043 = vmatprep.subr.bf16.mxu0 0
        %1044 = vmatpush1.bf16.msra.mxu0 0
        %1045 = vmatprep.subr.bf16.mxu0 0
        %1046 = vmatpush1.bf16.msra.mxu0 0
        %1047 = vmatprep.subr.bf16.mxu0 0
        %1048 = vmatpush1.bf16.msra.mxu0 0
        %1049 = vmatprep.subr.bf16.mxu0 0
        %1050 = vmatpush1.bf16.msra.mxu0 0
        %1051 = vmatprep.subr.bf16.mxu0 0
        %1052 = vmatpush1.bf16.msra.mxu0 0
        %1053 = vmatprep.subr.bf16.mxu0 0
        %1054 = vmatpush1.bf16.msra.mxu0 %v1037
        %1055 = vmatprep.subr.bf16.mxu0 0
        %1056 = vmatpush2.bf16.msra.mxu0 0
        %1057 = vmatprep.subr.bf16.mxu0 0
        %1058 = vmatpush2.bf16.msra.mxu0 0
        %1059 = vmatprep.subr.bf16.mxu0 0
        %1060 = vmatpush2.bf16.msra.mxu0 0
        %1061 = vmatprep.subr.bf16.mxu0 0
        %1062 = vmatpush2.bf16.msra.mxu0 0
        %1063 = vmatprep.subr.bf16.mxu0 0
        %1064 = vmatpush2.bf16.msra.mxu0 0
        %1065 = vmatprep.subr.bf16.mxu0 0
        %1066 = vmatpush2.bf16.msra.mxu0 0
        %1067 = vmatprep.subr.bf16.mxu0 0
        %1068 = vmatpush2.bf16.msra.mxu0 0
        %1069 = vmatprep.subr.bf16.mxu0 0
        %1070 = vmatpush2.bf16.msra.mxu0 0
        %1071 = vmatprep.mubr.bf16.mxu0 0
        %1072 = vmatmul.mubr.bf16.gmra.mxu0 %v1034
        %v1073 = vpop.f32.mrf.mxu0
        %v1074 = vadd.f32 0.0, %v1073
        %v1075 = vpop.f32.mrf.mxu0
        %v1076 = vpop.f32.mrf.mxu0
        %v1077 = vpop.f32.mrf.mxu0
        %1078 = vdwg.mxu0
        %v1079 = vpack.c.bf16 %v1074, %v1074
        %v1081 = vunpack.c.l.b16 %v1079
        %v1082 = vpack.c.b16 %v1081, %v1081
        %1083 = vrot.lane.b32.xlu0 %v1082, 16
        %v1084 = vpop.permute.xlu0 %1083
        %vm1086 = vcmask 191616
        %1087 = vst.msk [vmem:[#allocation2] sm:$0xf] %vm1086, %v1084
        %1088 = vrot.lane.b32.xlu0 %v735, 104
        %v1089 = vpop.permute.xlu0 %1088
        %1090 = vrot.lane.b32.xlu0 %v736, 104
        %v1091 = vpop.permute.xlu0 %1090
        %v1093 = vsel %vm738, %v1089, 0
        %v1096 = vsel %vm738, %v1091, 0
        %1098 = vmatprep.subr.bf16.mxu0 0
        %1099 = vmatpush1.bf16.xpose.msra.mxu0 0
        %1100 = vmatprep.subr.bf16.mxu0 0
        %1101 = vmatpush1.bf16.xpose.msra.mxu0 0
        %1102 = vmatprep.subr.bf16.mxu0 0
        %1103 = vmatpush1.bf16.xpose.msra.mxu0 0
        %1104 = vmatprep.subr.bf16.mxu0 0
        %1105 = vmatpush1.bf16.xpose.msra.mxu0 0
        %1106 = vmatprep.subr.bf16.mxu0 0
        %1107 = vmatpush1.bf16.xpose.msra.mxu0 0
        %1108 = vmatprep.subr.bf16.mxu0 0
        %1109 = vmatpush1.bf16.xpose.msra.mxu0 0
        %1110 = vmatprep.subr.bf16.mxu0 0
        %1111 = vmatpush1.bf16.xpose.msra.mxu0 0
        %1112 = vmatprep.subr.bf16.mxu0 0
        %1113 = vmatpush1.bf16.xpose.msra.mxu0 %v1096
        %1114 = vmatprep.subr.bf16.mxu0 0
        %1115 = vmatpush2.bf16.xpose.msra.mxu0 0
        %1116 = vmatprep.subr.bf16.mxu0 0
        %1117 = vmatpush2.bf16.xpose.msra.mxu0 0
        %1118 = vmatprep.subr.bf16.mxu0 0
        %1119 = vmatpush2.bf16.xpose.msra.mxu0 0
        %1120 = vmatprep.subr.bf16.mxu0 0
        %1121 = vmatpush2.bf16.xpose.msra.mxu0 0
        %1122 = vmatprep.subr.bf16.mxu0 0
        %1123 = vmatpush2.bf16.xpose.msra.mxu0 0
        %1124 = vmatprep.subr.bf16.mxu0 0
        %1125 = vmatpush2.bf16.xpose.msra.mxu0 0
        %1126 = vmatprep.subr.bf16.mxu0 0
        %1127 = vmatpush2.bf16.xpose.msra.mxu0 0
        %1128 = vmatprep.subr.bf16.mxu0 0
        %1129 = vmatpush2.bf16.xpose.msra.mxu0 0
        %1130 = vmatprep.mubr.bf16.mxu0 0
        %1131 = vmatmul.mubr.bf16.gmra.mxu0 %v1093
        %v1132 = vpop.f32.mrf.mxu0
        %v1133 = vadd.f32 0.0, %v1132
        %v1134 = vpop.f32.mrf.mxu0
        %v1135 = vpop.f32.mrf.mxu0
        %v1136 = vpop.f32.mrf.mxu0
        %1137 = vdwg.mxu0
        %v1138 = vsel %vm738, %v1133, -inf
        %1139 = vmax.xlane.f32.xlu0 %v1138
        %v1140 = vpop.xlane.xlu0 %1139
        %v1141 = vsub.f32 %v1133, %v1140
        %v1142 = vmul.f32 %v1141, 1.442695
        %v1143 = vpow.pop %v1142
        %v1144 = vsel %vm738, %v1143, 0.0
        %1145 = vadd.xlane.f32.xlu0 %v1144
        %v1146 = vpop.xlane.xlu0 %1145
        %v1147 = vrcp.pop %v1146
        %v1148 = vmul.f32 %v1143, %v1147
        %v1149 = vpack.c.bf16 %v1148, %v1148
        %1150 = vrot.lane.b32.xlu0 %v737, 104
        %v1151 = vpop.permute.xlu0 %1150
        %v1153 = vsel %vm738, %v1149, 0
        %v1156 = vsel %vm800, %v1151, 0
        %1158 = vmatprep.subr.bf16.mxu0 0
        %1159 = vmatpush1.bf16.msra.mxu0 0
        %1160 = vmatprep.subr.bf16.mxu0 0
        %1161 = vmatpush1.bf16.msra.mxu0 0
        %1162 = vmatprep.subr.bf16.mxu0 0
        %1163 = vmatpush1.bf16.msra.mxu0 0
        %1164 = vmatprep.subr.bf16.mxu0 0
        %1165 = vmatpush1.bf16.msra.mxu0 0
        %1166 = vmatprep.subr.bf16.mxu0 0
        %1167 = vmatpush1.bf16.msra.mxu0 0
        %1168 = vmatprep.subr.bf16.mxu0 0
        %1169 = vmatpush1.bf16.msra.mxu0 0
        %1170 = vmatprep.subr.bf16.mxu0 0
        %1171 = vmatpush1.bf16.msra.mxu0 0
        %1172 = vmatprep.subr.bf16.mxu0 0
        %1173 = vmatpush1.bf16.msra.mxu0 %v1156
        %1174 = vmatprep.subr.bf16.mxu0 0
        %1175 = vmatpush2.bf16.msra.mxu0 0
        %1176 = vmatprep.subr.bf16.mxu0 0
        %1177 = vmatpush2.bf16.msra.mxu0 0
        %1178 = vmatprep.subr.bf16.mxu0 0
        %1179 = vmatpush2.bf16.msra.mxu0 0
        %1180 = vmatprep.subr.bf16.mxu0 0
        %1181 = vmatpush2.bf16.msra.mxu0 0
        %1182 = vmatprep.subr.bf16.mxu0 0
        %1183 = vmatpush2.bf16.msra.mxu0 0
        %1184 = vmatprep.subr.bf16.mxu0 0
        %1185 = vmatpush2.bf16.msra.mxu0 0
        %1186 = vmatprep.subr.bf16.mxu0 0
        %1187 = vmatpush2.bf16.msra.mxu0 0
        %1188 = vmatprep.subr.bf16.mxu0 0
        %1189 = vmatpush2.bf16.msra.mxu0 0
        %1190 = vmatprep.mubr.bf16.mxu0 0
        %1191 = vmatmul.mubr.bf16.gmra.mxu0 %v1153
        %v1192 = vpop.f32.mrf.mxu0
        %v1193 = vadd.f32 0.0, %v1192
        %v1194 = vpop.f32.mrf.mxu0
        %v1195 = vpop.f32.mrf.mxu0
        %v1196 = vpop.f32.mrf.mxu0
        %1197 = vdwg.mxu0
        %v1198 = vpack.c.bf16 %v1193, %v1193
        %v1200 = vunpack.c.l.b16 %v1198
        %v1201 = vpack.c.b16 %v1200, %v1200
        %1202 = vrot.lane.b32.xlu0 %v1201, 24
        %v1203 = vpop.permute.xlu0 %1202
        %vm1205 = vcmask 257216
        %1206 = vst.msk [vmem:[#allocation2] sm:$0xf] %vm1205, %v1203
        %v1207 = vld [vmem:[#allocation2] sm:$0xf]
        %v1208 = vld [vmem:[#allocation14] sm:$0xf]
        %v1209 = vld [vmem:[#allocation14 + $0x4] sm:$0xf]
        %v1210 = vld [vmem:[#allocation14 + $0x8] sm:$0xf]
        %v1211 = vld [vmem:[#allocation14 + $0xc] sm:$0xf]
        %v1212 = vld [vmem:[%s10] sm:$0x1]
        %v1214 = vlaneseq
        %v1215 = vshrl.u32 %v1214, 7
        %v1216 = vsub.s32 0, %v1215
        %v1217 = vrot.slane %v1212, %v1216
        %v1223 = vunpack.c.l.b16 %v1208
        %v1224 = vunpack.c.l.b16 %v1209
        %v1225 = vunpack.c.l.b16 %v1210
        %v1226 = vunpack.c.l.b16 %v1211
        %v1227 = vpack.c.b16 %v1224, %v1223
        %v1228 = vpack.c.b16 %v1226, %v1225
        %v1232 = vsel %vm558, %v1207, 0
        %1234 = vmatprep.subr.bf16.mxu0 0
        %1235 = vmatpush1.bf16.msra.mxu0 0
        %1236 = vmatprep.subr.bf16.mxu0 0
        %1237 = vmatpush1.bf16.msra.mxu0 0
        %1238 = vmatprep.subr.bf16.mxu0 0
        %1239 = vmatpush1.bf16.msra.mxu0 0
        %1240 = vmatprep.subr.bf16.mxu0 0
        %1241 = vmatpush1.bf16.msra.mxu0 0
        %1242 = vmatprep.subr.bf16.mxu0 0
        %1243 = vmatpush1.bf16.msra.mxu0 0
        %1244 = vmatprep.subr.bf16.mxu0 0
        %1245 = vmatpush1.bf16.msra.mxu0 0
        %1246 = vmatprep.subr.bf16.mxu0 0
        %1247 = vmatpush1.bf16.msra.mxu0 %v1228
        %1248 = vmatprep.subr.bf16.mxu0 0
        %1249 = vmatpush1.bf16.msra.mxu0 %v1227
        %1250 = vmatprep.subr.bf16.mxu0 0
        %1251 = vmatpush2.bf16.msra.mxu0 0
        %1252 = vmatprep.subr.bf16.mxu0 0
        %1253 = vmatpush2.bf16.msra.mxu0 0
        %1254 = vmatprep.subr.bf16.mxu0 0
        %1255 = vmatpush2.bf16.msra.mxu0 0
        %1256 = vmatprep.subr.bf16.mxu0 0
        %1257 = vmatpush2.bf16.msra.mxu0 0
        %1258 = vmatprep.subr.bf16.mxu0 0
        %1259 = vmatpush2.bf16.msra.mxu0 0
        %1260 = vmatprep.subr.bf16.mxu0 0
        %1261 = vmatpush2.bf16.msra.mxu0 0
        %1262 = vmatprep.subr.bf16.mxu0 0
        %1263 = vmatpush2.bf16.msra.mxu0 0
        %1264 = vmatprep.subr.bf16.mxu0 0
        %1265 = vmatpush2.bf16.msra.mxu0 0
        %1266 = vmatprep.mubr.bf16.mxu0 0
        %1267 = vmatmul.mubr.bf16.gmra.mxu0 %v1232
        %v1268 = vpop.f32.mrf.mxu0
        %v1269 = vadd.f32 %v1217, %v1268
        %v1270 = vpop.f32.mrf.mxu0
        %v1271 = vpop.f32.mrf.mxu0
        %v1272 = vpop.f32.mrf.mxu0
        %1273 = vdwg.mxu0
        %1274 = vst.msk [vmem:[%s530] sm:$0xff] %vm558, %v1269
        %s1275 = sand.u32 %s287, 1
        %s1276 = scalar_lea.sflag [#allocation5], %s1275
        %s1277 = sand.u32 %s287, 1
        %s1278 = smul.addr %s1277, 8
        %s1279 = scalar_lea.vmem [#allocation15], %s1278
        // Predicated region
        $region93: #{tpu_custom_call.1} parent=63 // pred_check
          %p1280 = pneg %p297
        $region94: #{tpu_custom_call.1} parent=63 // pred_check_branch
          %1282 = sbr.rel (%p1280) target = $region96
        $region95: #{tpu_custom_call.1} parent=63 // pred_region
          %s1284 = ssub.s32 128, 128
          %1285 = vsyncadd %s1276, %s1284
          %s1286 = smul.addr %s33, 128
          %s1287 = scalar_lea.hbm %s11, %s1286
          %s1289 = sshll.u32 %s1279, 4
          %s1290 = int_to_ptr.vmem [resolvable:$true] %s1289
          %1292 = dma.vmem_to_hbm [thread:$0]  %s1290, 128, %s1287, %s1276
        $region96: #{tpu_custom_call.1} parent=63 // pred_fallthru
          _
      $region64: #{tpu_custom_call.1} parent=5 // pred_fallthru
        _
      %p1293 = scmp.le.s32.totalorder 2, %s28
      // Predicated region
      $region97: #{tpu_custom_call.1} parent=5 // pred_check
        %p1294 = pneg %p1293
      $region98: #{tpu_custom_call.1} parent=5 // pred_check_branch
        %1296 = sbr.rel (%p1294) target = $region100
      $region99: #{tpu_custom_call.1} parent=5 // pred_region
        %s1297 = ssub.s32 %s28, 2
        // Predicated region
        $region101: #{tpu_custom_call.1} parent=99 // pred_check
          %p1298 = pneg %p303
        $region102: #{tpu_custom_call.1} parent=99 // pred_check_branch
          %1300 = sbr.rel (%p1298) target = $region104
        $region103: #{tpu_custom_call.1} parent=99 // pred_region
          %s1301 = sand.u32 %s288, 1
          %s1302 = scalar_lea.sflag [#allocation5], %s1301
          %s1303 = sand.u32 %s288, 1
          %s1304 = smul.addr %s1303, 8
          %s1305 = scalar_lea.vmem [#allocation15], %s1304
          %1306 = dma.done %s1302, 128
        $region104: #{tpu_custom_call.1} parent=99 // pred_fallthru
          _
      $region100: #{tpu_custom_call.1} parent=5 // pred_fallthru
        _
    $region6: #{tpu_custom_call.1} parent=1 // loop_footer
      %s32 = sadd.s32 1, %s28
    $region7: #{tpu_custom_call.1} parent=1 // loop_footer_branch
      %27 = sbr.rel target = $region3
    $region8: #{tpu_custom_call.1} parent=1 // loop_exit
      _
    %1307 = vsyncpa [#allocation4], 1
    %s1308 = scalar_lea.sflag [#allocation4], 1
    %1309 = vsyncpa %s1308, 1
    %1310 = vsyncpa [#allocation7], 1
    %s1311 = scalar_lea.sflag [#allocation7], 1
    %1312 = vsyncpa %s1311, 1
    %1313 = vsyncpa [#allocation10], 1
    %1314 = vsyncpa [#allocation13], 1
    %1315 = vsyncpa [#allocation5], 1
    %s1316 = scalar_lea.sflag [#allocation5], 1
    %1317 = vsyncpa %s1316, 1

</llo_original>
